<compile_context>
chip_gen: v6e
topology: v6e:2x2x1
jax: 0.10.0
libtpu: 0.0.40
codegen_flags: <defaults>
</compile_context>

<pallas_src>
import jax
import jax.numpy as jnp
from jax.experimental import pallas as pl
from jax.experimental.pallas import tpu as pltpu


def mlp_kernel(x_ref, w1_ref, b1_ref, w2_ref, b2_ref, w3_ref, b3_ref, o_ref):
    """One batch tile: Linear->ReLU->(Dropout=id)->Linear->ReLU->(Dropout=id)->Linear."""
    # Layer 1: (TB, D) @ (D, 256) on the MXU, bf16 operands, f32 accumulate.
    x = x_ref[...].astype(jnp.bfloat16)
    h1 = jnp.dot(x, w1_ref[...], preferred_element_type=jnp.float32)
    # bf16 epilogue: one cast of the MXU result, bf16 bias add + ReLU.  Halves
    # VPU elementwise work and the live (TB,256) footprint on v6e/v7x and
    # feeds layer 2 directly (no separate repack).  Still correct on v5e.
    h1 = jnp.maximum(h1.astype(jnp.bfloat16) + b1_ref[...], 0)
    # Dropout (eval mode) == identity.

    # Layer 2: (TB, 256) @ (256, 128) on the MXU, f32 accumulate.
    h2 = jnp.dot(h1, w2_ref[...], preferred_element_type=jnp.float32)
    h2 = jnp.maximum(h2 + b2_ref[...], 0.0)   # f32 epilogue (feeds f32 output)
    # Dropout (eval mode) == identity.

    # Output layer (K=128, N=1): off the MXU, in natural layout.  VPU multiply
    # against the lane-dense (1,128) w3 row (lane-aligned row broadcast), then
    # an XLU lane-reduce.  No full (TB,128) transpose through the XLU.
    y = jnp.sum(h2 * w3_ref[...], axis=-1, keepdims=True)   # (TB, 1) f32
    # Store as a column.  Output volume is block_b*4 B per step, so the
    # 1-lane masked store is negligible and we skip any sublane->lane relayout.
    o_ref[...] = y + b3_ref[0, 0]                            # scalar bias (SMEM)


def mlp_forward(x, params, *, block_b=512):
    """Fused 3-layer MLP forward, tiled over the batch dimension.

    block_b: rows per grid step (must be a multiple of 128).  Default 512:
    amortizes the ~0.35 us per-step overhead and fills the 256-wide v6e/v7x
    MXU in M; sweep 512-1024.  VMEM cost is trivial (~100 KiB resident
    weights + 2x block_b*D*4 streamed x + block_b*(256+128)*4 activations),
    so never shrink the tile for VMEM reasons — even on v7x's 64 MiB.  For
    v7x megacore, pick block_b so that cdiv(B, block_b) >= 2.
    """
    w1, b1, w2, b2, w3_row, b3 = params
    B, D = x.shape
    H1 = w1.shape[1]
    H2 = w2.shape[1]
    if block_b % 128 != 0:
        raise ValueError(f"block_b must be a multiple of 128, got {block_b}")

    # Pad the batch to a multiple of the tile; padded rows are sliced off below.
    nb = pl.cdiv(B, block_b)
    b_pad = nb * block_b
    if b_pad != B:
        x = jnp.pad(x, ((0, b_pad - B), (0, 0)))

    const = lambda i: (0, 0)   # weights/biases: VMEM-resident across all tiles

    out = pl.pallas_call(
        mlp_kernel,
        grid=(nb,),
        out_shape=jax.ShapeDtypeStruct((b_pad, 1), jnp.float32),
        in_specs=[
            # x streamed per batch tile (double-buffered by Pallas).  If the x
            # DMA ever shows exposed in a bundle after enlarging the tile, bump
            # pipeline depth with pipeline_mode=pl.Buffered(3) rather than
            # shrinking block_b.
            pl.BlockSpec((block_b, D), lambda i: (i, 0)),
            pl.BlockSpec((D, H1), const),                        # w1 (bf16)
            pl.BlockSpec((1, H1), const),                        # b1 (bf16)
            pl.BlockSpec((H1, H2), const),                       # w2 (bf16)
            pl.BlockSpec((1, H2), const),                        # b2 (f32)
            pl.BlockSpec((1, H2), const),                        # w3 row (f32)
            pl.BlockSpec(memory_space=pltpu.MemorySpace.SMEM),   # b3 scalar
        ],
        out_specs=pl.BlockSpec((block_b, 1), lambda i: (i, 0)),
        compiler_params=pltpu.CompilerParams(
            dimension_semantics=("parallel",),   # batch tiles shard across TCs (v7x)
            vmem_limit_bytes=32 * 1024 * 1024,
        ),
    )(x, w1, b1, w2, b2, w3_row, b3)

    return out[:B]


def init_linear(key, fan_in, fan_out, w_dtype=jnp.float32, b_dtype=jnp.float32):
    """PyTorch nn.Linear-style U(-1/sqrt(fan_in), +) init; weight stored [in, out]."""
    kw, kb = jax.random.split(key)
    bound = 1.0 / (fan_in ** 0.5)
    w = jax.random.uniform(kw, (fan_in, fan_out), jnp.float32, -bound, bound)
    b = jax.random.uniform(kb, (1, fan_out), jnp.float32, -bound, bound)
    return w.astype(w_dtype), b.astype(b_dtype)


def make_params(key, input_dim, hidden_dims=(256, 128)):
    k1, k2, k3 = jax.random.split(key, 3)
    # Hidden-layer weights (and b1, for the bf16 epilogue) in bf16; b2 and the
    # tiny final layer stay f32.  w3 stored as a lane-dense (1, 128) row.
    w1, b1 = init_linear(k1, input_dim, hidden_dims[0],
                         w_dtype=jnp.bfloat16, b_dtype=jnp.bfloat16)
    w2, b2 = init_linear(k2, hidden_dims[0], hidden_dims[1],
                         w_dtype=jnp.bfloat16, b_dtype=jnp.float32)
    w3_col, b3 = init_linear(k3, hidden_dims[1], 1)          # (128,1), (1,1) f32
    w3_row = w3_col.T                                        # (1, 128) lane-dense
    return (w1, b1, w2, b2, w3_row, b3)


if __name__ == "__main__":
    B = 1024         # two 512-row tiles -> >=2 grid steps (exercises pipelining + v7x megacore)
    INPUT_DIM = 32

    key = jax.random.PRNGKey(0)
    kx, kp = jax.random.split(key)
    x = jax.random.normal(kx, (B, INPUT_DIM), dtype=jnp.float32)
    params = make_params(kp, INPUT_DIM)

    out = jax.block_until_ready(mlp_forward(x, params, block_b=512))
    assert out.shape == (B, 1) and out.dtype == jnp.float32

    # Pure-JAX reference of the same dtype flow (bf16 operands, f32 accumulate,
    # bf16 layer-1 epilogue, f32 layer-2 epilogue and output layer).
    w1, b1, w2, b2, w3_row, b3 = params
    xb = x.astype(jnp.bfloat16)
    h1 = jnp.dot(xb, w1, preferred_element_type=jnp.float32)
    h1 = jnp.maximum(h1.astype(jnp.bfloat16) + b1, 0)
    h2 = jnp.dot(h1, w2, preferred_element_type=jnp.float32)
    h2 = jnp.maximum(h2 + b2, 0.0)
    ref = jnp.sum(h2 * w3_row, axis=-1, keepdims=True) + b3[0, 0]
    err = float(jnp.max(jnp.abs(out - ref)))
    assert jnp.allclose(out, ref, atol=1e-2, rtol=1e-2), err

    print("KERNEL_OK")
</pallas_src>

<mosaic_0001>
module attributes {stable_mosaic.version = 11 : i64} {
  func.func @mlp_kernel(%arg0: i32, %arg1: memref<512x32xf32, #tpu.memory_space<vmem>>, %arg2: memref<32x256xbf16, #tpu.memory_space<vmem>>, %arg3: memref<1x256xbf16, #tpu.memory_space<vmem>>, %arg4: memref<256x128xbf16, #tpu.memory_space<vmem>>, %arg5: memref<1x128xf32, #tpu.memory_space<vmem>>, %arg6: memref<1x128xf32, #tpu.memory_space<vmem>>, %arg7: memref<1x1xf32, #tpu.memory_space<smem>>, %arg8: memref<512x1xf32, #tpu.memory_space<vmem>>) attributes {dimension_semantics = [#tpu.dimension_semantics<parallel>], iteration_bounds = array<i64: 2>, scalar_prefetch = 0 : i64, scratch_operands = 0 : i64, tpu.core_type = #tpu.core_type<tc>, window_params = [{transform_indices = @transform_0, window_bounds = array<i64: 512, 32>}, {pipeline_mode = #tpu.pipeline_mode<synchronous>, transform_indices = @transform_1, window_bounds = array<i64: 32, 256>}, {pipeline_mode = #tpu.pipeline_mode<synchronous>, transform_indices = @transform_2, window_bounds = array<i64: 1, 256>}, {pipeline_mode = #tpu.pipeline_mode<synchronous>, transform_indices = @transform_3, window_bounds = array<i64: 256, 128>}, {pipeline_mode = #tpu.pipeline_mode<synchronous>, transform_indices = @transform_4, window_bounds = array<i64: 1, 128>}, {pipeline_mode = #tpu.pipeline_mode<synchronous>, transform_indices = @transform_5, window_bounds = array<i64: 1, 128>}, {transform_indices = @transform_6, window_bounds = array<i64: 1, 1>}, {transform_indices = @transform_7, window_bounds = array<i64: 512, 1>}]} {
    %c0 = arith.constant 0 : index
    %c0_0 = arith.constant 0 : index
    %0 = vector.load %arg1[%c0, %c0_0] : memref<512x32xf32, #tpu.memory_space<vmem>>, vector<512x32xf32>
    %1 = arith.truncf %0 : vector<512x32xf32> to vector<512x32xbf16>
    %c0_1 = arith.constant 0 : index
    %c0_2 = arith.constant 0 : index
    %2 = vector.load %arg2[%c0_1, %c0_2] : memref<32x256xbf16, #tpu.memory_space<vmem>>, vector<32x256xbf16>
    %cst = arith.constant dense<0.000000e+00> : vector<512x256xf32>
    %3 = tpu.matmul %1, %2, %cst {dimension_numbers = #tpu.dot_dimension_numbers<[1], [0], [0], [1], [0, 0, 1, 1], [], []>} : vector<512x32xbf16>, vector<32x256xbf16>, vector<512x256xf32> -> vector<512x256xf32>
    %4 = arith.truncf %3 : vector<512x256xf32> to vector<512x256xbf16>
    %c0_3 = arith.constant 0 : index
    %c0_4 = arith.constant 0 : index
    %5 = vector.load %arg3[%c0_3, %c0_4] : memref<1x256xbf16, #tpu.memory_space<vmem>>, vector<1x256xbf16>
    %6 = vector.broadcast %5 : vector<1x256xbf16> to vector<512x256xbf16>
    %7 = arith.addf %4, %6 : vector<512x256xbf16>
    %cst_5 = arith.constant 0.000000e+00 : bf16
    %8 = vector.broadcast %cst_5 : bf16 to vector<512x256xbf16>
    %9 = arith.maximumf %7, %8 : vector<512x256xbf16>
    %c0_6 = arith.constant 0 : index
    %c0_7 = arith.constant 0 : index
    %10 = vector.load %arg4[%c0_6, %c0_7] : memref<256x128xbf16, #tpu.memory_space<vmem>>, vector<256x128xbf16>
    %cst_8 = arith.constant dense<0.000000e+00> : vector<512x128xf32>
    %11 = tpu.matmul %9, %10, %cst_8 {dimension_numbers = #tpu.dot_dimension_numbers<[1], [0], [0], [1], [0, 0, 1, 1], [], []>} : vector<512x256xbf16>, vector<256x128xbf16>, vector<512x128xf32> -> vector<512x128xf32>
    %c0_9 = arith.constant 0 : index
    %c0_10 = arith.constant 0 : index
    %12 = vector.load %arg5[%c0_9, %c0_10] : memref<1x128xf32, #tpu.memory_space<vmem>>, vector<1x128xf32>
    %13 = vector.broadcast %12 : vector<1x128xf32> to vector<512x128xf32>
    %14 = arith.addf %11, %13 : vector<512x128xf32>
    %cst_11 = arith.constant 0.000000e+00 : f32
    %15 = vector.broadcast %cst_11 : f32 to vector<512x128xf32>
    %16 = arith.maximumf %14, %15 : vector<512x128xf32>
    %c0_12 = arith.constant 0 : index
    %c0_13 = arith.constant 0 : index
    %17 = vector.load %arg6[%c0_12, %c0_13] : memref<1x128xf32, #tpu.memory_space<vmem>>, vector<1x128xf32>
    %18 = vector.broadcast %17 : vector<1x128xf32> to vector<512x128xf32>
    %19 = arith.mulf %16, %18 : vector<512x128xf32>
    %cst_14 = arith.constant dense<0.000000e+00> : vector<512xf32>
    %20 = vector.multi_reduction <add>, %19, %cst_14 [1] : vector<512x128xf32> to vector<512xf32>
    %21 = vector.shape_cast %20 : vector<512xf32> to vector<512x1xf32>
    %c0_15 = arith.constant 0 : index
    %c0_16 = arith.constant 0 : index
    %22 = memref.load %arg7[%c0_15, %c0_16] : memref<1x1xf32, #tpu.memory_space<smem>>
    %23 = vector.broadcast %22 : f32 to vector<512x1xf32>
    %24 = arith.addf %21, %23 : vector<512x1xf32>
    %c0_17 = arith.constant 0 : index
    %c0_18 = arith.constant 0 : index
    %25 = vector.load %arg8[%c0_17, %c0_18] : memref<512x1xf32, #tpu.memory_space<vmem>>, vector<512x1xf32>
    tpu.vector_store %arg8[%c0_17, %c0_18], %24 {strides = array<i32>} : memref<512x1xf32, #tpu.memory_space<vmem>>, vector<512x1xf32>,
    return
  }
  func.func @transform_0(%arg0: i32) -> (i32, i32) {
    %c0_i32 = arith.constant 0 : i32
    %c0_i32_0 = arith.constant 0 : i32
    return %arg0, %c0_i32 : i32, i32
  }
  func.func @transform_1(%arg0: i32) -> (i32, i32) {
    %c0_i32 = arith.constant 0 : i32
    %c0_i32_0 = arith.constant 0 : i32
    %c0_i32_1 = arith.constant 0 : i32
    return %c0_i32, %c0_i32_0 : i32, i32
  }
  func.func @transform_2(%arg0: i32) -> (i32, i32) {
    %c0_i32 = arith.constant 0 : i32
    %c0_i32_0 = arith.constant 0 : i32
    %c0_i32_1 = arith.constant 0 : i32
    return %c0_i32, %c0_i32_0 : i32, i32
  }
  func.func @transform_3(%arg0: i32) -> (i32, i32) {
    %c0_i32 = arith.constant 0 : i32
    %c0_i32_0 = arith.constant 0 : i32
    %c0_i32_1 = arith.constant 0 : i32
    return %c0_i32, %c0_i32_0 : i32, i32
  }
  func.func @transform_4(%arg0: i32) -> (i32, i32) {
    %c0_i32 = arith.constant 0 : i32
    %c0_i32_0 = arith.constant 0 : i32
    %c0_i32_1 = arith.constant 0 : i32
    return %c0_i32, %c0_i32_0 : i32, i32
  }
  func.func @transform_5(%arg0: i32) -> (i32, i32) {
    %c0_i32 = arith.constant 0 : i32
    %c0_i32_0 = arith.constant 0 : i32
    %c0_i32_1 = arith.constant 0 : i32
    return %c0_i32, %c0_i32_0 : i32, i32
  }
  func.func @transform_6(%arg0: i32) -> (i32, i32) {
    %c0_i32 = arith.constant 0 : i32
    %c0_i32_0 = arith.constant 0 : i32
    %c0_i32_1 = arith.constant 0 : i32
    return %c0_i32, %c0_i32_0 : i32, i32
  }
  func.func @transform_7(%arg0: i32) -> (i32, i32) {
    %c0_i32 = arith.constant 0 : i32
    %c0_i32_0 = arith.constant 0 : i32
    return %arg0, %c0_i32 : i32, i32
  }
}

</mosaic_0001>

<llo_original>
// kernel: tpu_custom_call.1
$region0: #{tpu_custom_call.1}
  #allocation0 [shape = 'u32[]', space=smem, size = 0x4, offset = 0x4, fixed_abs, tag = 'smem constant byte address 0x4 - core index']
  #allocation1 [shape = 'u32[144,128]{1,0:T(1,128)}', space=vmem, size = 0x12000, scoped, tag = 'internal scratch']
  #allocation2 [shape = 'f32[1,1]{1,0:T(1,128)S(6)}', space=smem, size = 0x200, scoped, tag = 'scoped memory for tpu_custom_call.1']
  %s0 = inlined_call_operand.vmem [shape: f32[1024,32], index: 0, kind: input, shape index: {}]
  %s1 = inlined_call_operand.vmem [shape: bf16[32,256], index: 1, kind: input, shape index: {}]
  %s2 = inlined_call_operand.vmem [shape: bf16[1,256], index: 2, kind: input, shape index: {}]
  %s3 = inlined_call_operand.vmem [shape: bf16[256,128], index: 3, kind: input, shape index: {}]
  %s4 = inlined_call_operand.vmem [shape: f32[1,128], index: 4, kind: input, shape index: {}]
  %s5 = inlined_call_operand.vmem [shape: f32[1,128], index: 5, kind: input, shape index: {}]
  %s6 = inlined_call_operand.<no memory space> [shape: f32[1,1], index: 6, kind: input, shape index: {}]
  %s7 = inlined_call_operand.vmem [shape: f32[1024,1], index: 7, kind: output, shape index: {}]
  %s8 = sld [smem:[#allocation0]]
  $region61: #{tpu_custom_call.1} parent=0
    _
  %s10 = ssub.s32 1, %s8
  %s11 = scalar_select 0, %s10, %s8
  %12 = sst [smem:[#allocation2]] %s6
  loop: start=0, step=1, limit=4
  $region2: #{tpu_custom_call.1} parent=0 // loop_pre_header
    _
  $region3: #{tpu_custom_call.1} parent=0 // loop_header
    %s14 = sphi 0, %s18
    %p15 = scmp.ge.s32.totalorder %s14, 4
    %s24 = sphi 0, %s26
    %s27 = sphi 0, %s24
    %s28 = sphi 0, %s27
    %s44 = sphi 0, %s28
    %s48 = sphi 0, %s48
    %s50 = sphi 0, %s48
    %s51 = sphi 0, %s50
    %s65 = sphi 0, %s51
    %s69 = sphi 0, %s69
    %s71 = sphi 0, %s69
    %s72 = sphi 0, %s71
    %s86 = sphi 0, %s72
    %s90 = sphi 0, %s90
    %s92 = sphi 0, %s90
    %s93 = sphi 0, %s92
    %s107 = sphi 0, %s93
    %s111 = sphi 0, %s111
    %s113 = sphi 0, %s111
    %s114 = sphi 0, %s113
    %s128 = sphi 0, %s114
    %s132 = sphi 0, %s132
    %s134 = sphi 0, %s132
    %s135 = sphi 0, %s134
    %s149 = sphi 0, %s135
    %s153 = sphi 0, %s153
    %s155 = sphi 0, %s153
    %s156 = sphi 0, %s155
    %s170 = sphi 0, %s156
    %s176 = sphi 0, %s178
    %s179 = sphi 0, %s176
    %s180 = sphi 0, %s179
    %s196 = sphi 0, %s180
  $region4: #{tpu_custom_call.1} parent=0 // loop_header_branch
    %17 = sbr.rel (%p15) target = $region8
  $region5: #{tpu_custom_call.1} parent=0 // loop_body
    %s19 = ssub.s32 %s14, 1
    %s20 = ssub.s32 %s14, 2
    %s21 = sadd.s32 %s14, 1
    %s22 = ssub.s32 %s14, %s21
    %p23 = scmp.eq.s32.totalorder %s22, 0
    %s25 = sadd.s32 %s24, 1
    %s26 = scalar_select %p23, %s24, %s25
    %p29 = pneg %p23
    %p30 = scmp.eq.s32.totalorder %s14, 1
    %p31 = por %p29, %p30
    %p32 = scmp.ne.s32.totalorder %s24, %s27
    %p33 = scmp.eq.s32.totalorder %s14, 0
    %p34 = por %p32, %p33
    %p35 = scmp.ne.s32.totalorder %s24, %s27
    %p36 = scmp.eq.s32.totalorder %s19, 1
    %p37 = por %p35, %p36
    %p38 = scmp.ne.s32.totalorder %s27, %s28
    %p39 = scmp.eq.s32.totalorder %s19, 0
    %p40 = por %p38, %p39
    %p41 = scmp.ne.s32.totalorder %s27, %s28
    %p42 = scmp.eq.s32.totalorder %s20, 1
    %p43 = por %p41, %p42
    %p45 = scmp.ne.s32.totalorder %s28, %s44
    %p46 = scmp.eq.s32.totalorder %s20, 0
    %p47 = por %p45, %p46
    %s49 = sadd.s32 %s48, 1
    %p52 = scmp.eq.s32.totalorder %s14, 1
    %p53 = scmp.ne.s32.totalorder %s48, %s50
    %p54 = scmp.eq.s32.totalorder %s14, 0
    %p55 = por %p53, %p54
    %p56 = scmp.ne.s32.totalorder %s48, %s50
    %p57 = scmp.eq.s32.totalorder %s19, 1
    %p58 = por %p56, %p57
    %p59 = scmp.ne.s32.totalorder %s50, %s51
    %p60 = scmp.eq.s32.totalorder %s19, 0
    %p61 = por %p59, %p60
    %p62 = scmp.ne.s32.totalorder %s50, %s51
    %p63 = scmp.eq.s32.totalorder %s20, 1
    %p64 = por %p62, %p63
    %p66 = scmp.ne.s32.totalorder %s51, %s65
    %p67 = scmp.eq.s32.totalorder %s20, 0
    %p68 = por %p66, %p67
    %s70 = sadd.s32 %s69, 1
    %p73 = scmp.eq.s32.totalorder %s14, 1
    %p74 = scmp.ne.s32.totalorder %s69, %s71
    %p75 = scmp.eq.s32.totalorder %s14, 0
    %p76 = por %p74, %p75
    %p77 = scmp.ne.s32.totalorder %s69, %s71
    %p78 = scmp.eq.s32.totalorder %s19, 1
    %p79 = por %p77, %p78
    %p80 = scmp.ne.s32.totalorder %s71, %s72
    %p81 = scmp.eq.s32.totalorder %s19, 0
    %p82 = por %p80, %p81
    %p83 = scmp.ne.s32.totalorder %s71, %s72
    %p84 = scmp.eq.s32.totalorder %s20, 1
    %p85 = por %p83, %p84
    %p87 = scmp.ne.s32.totalorder %s72, %s86
    %p88 = scmp.eq.s32.totalorder %s20, 0
    %p89 = por %p87, %p88
    %s91 = sadd.s32 %s90, 1
    %p94 = scmp.eq.s32.totalorder %s14, 1
    %p95 = scmp.ne.s32.totalorder %s90, %s92
    %p96 = scmp.eq.s32.totalorder %s14, 0
    %p97 = por %p95, %p96
    %p98 = scmp.ne.s32.totalorder %s90, %s92
    %p99 = scmp.eq.s32.totalorder %s19, 1
    %p100 = por %p98, %p99
    %p101 = scmp.ne.s32.totalorder %s92, %s93
    %p102 = scmp.eq.s32.totalorder %s19, 0
    %p103 = por %p101, %p102
    %p104 = scmp.ne.s32.totalorder %s92, %s93
    %p105 = scmp.eq.s32.totalorder %s20, 1
    %p106 = por %p104, %p105
    %p108 = scmp.ne.s32.totalorder %s93, %s107
    %p109 = scmp.eq.s32.totalorder %s20, 0
    %p110 = por %p108, %p109
    %s112 = sadd.s32 %s111, 1
    %p115 = scmp.eq.s32.totalorder %s14, 1
    %p116 = scmp.ne.s32.totalorder %s111, %s113
    %p117 = scmp.eq.s32.totalorder %s14, 0
    %p118 = por %p116, %p117
    %p119 = scmp.ne.s32.totalorder %s111, %s113
    %p120 = scmp.eq.s32.totalorder %s19, 1
    %p121 = por %p119, %p120
    %p122 = scmp.ne.s32.totalorder %s113, %s114
    %p123 = scmp.eq.s32.totalorder %s19, 0
    %p124 = por %p122, %p123
    %p125 = scmp.ne.s32.totalorder %s113, %s114
    %p126 = scmp.eq.s32.totalorder %s20, 1
    %p127 = por %p125, %p126
    %p129 = scmp.ne.s32.totalorder %s114, %s128
    %p130 = scmp.eq.s32.totalorder %s20, 0
    %p131 = por %p129, %p130
    %s133 = sadd.s32 %s132, 1
    %p136 = scmp.eq.s32.totalorder %s14, 1
    %p137 = scmp.ne.s32.totalorder %s132, %s134
    %p138 = scmp.eq.s32.totalorder %s14, 0
    %p139 = por %p137, %p138
    %p140 = scmp.ne.s32.totalorder %s132, %s134
    %p141 = scmp.eq.s32.totalorder %s19, 1
    %p142 = por %p140, %p141
    %p143 = scmp.ne.s32.totalorder %s134, %s135
    %p144 = scmp.eq.s32.totalorder %s19, 0
    %p145 = por %p143, %p144
    %p146 = scmp.ne.s32.totalorder %s134, %s135
    %p147 = scmp.eq.s32.totalorder %s20, 1
    %p148 = por %p146, %p147
    %p150 = scmp.ne.s32.totalorder %s135, %s149
    %p151 = scmp.eq.s32.totalorder %s20, 0
    %p152 = por %p150, %p151
    %s154 = sadd.s32 %s153, 1
    %p157 = scmp.eq.s32.totalorder %s14, 1
    %p158 = scmp.ne.s32.totalorder %s153, %s155
    %p159 = scmp.eq.s32.totalorder %s14, 0
    %p160 = por %p158, %p159
    %p161 = scmp.ne.s32.totalorder %s153, %s155
    %p162 = scmp.eq.s32.totalorder %s19, 1
    %p163 = por %p161, %p162
    %p164 = scmp.ne.s32.totalorder %s155, %s156
    %p165 = scmp.eq.s32.totalorder %s19, 0
    %p166 = por %p164, %p165
    %p167 = scmp.ne.s32.totalorder %s155, %s156
    %p168 = scmp.eq.s32.totalorder %s20, 1
    %p169 = por %p167, %p168
    %p171 = scmp.ne.s32.totalorder %s156, %s170
    %p172 = scmp.eq.s32.totalorder %s20, 0
    %p173 = por %p171, %p172
    %s174 = ssub.s32 %s14, %s21
    %p175 = scmp.eq.s32.totalorder %s174, 0
    %s177 = sadd.s32 %s176, 1
    %s178 = scalar_select %p175, %s176, %s177
    %p181 = pneg %p175
    %p182 = scmp.eq.s32.totalorder %s14, 1
    %p183 = por %p181, %p182
    %p184 = scmp.ne.s32.totalorder %s176, %s179
    %p185 = scmp.eq.s32.totalorder %s14, 0
    %p186 = por %p184, %p185
    %p187 = scmp.ne.s32.totalorder %s176, %s179
    %p188 = scmp.eq.s32.totalorder %s19, 1
    %p189 = por %p187, %p188
    %p190 = scmp.ne.s32.totalorder %s179, %s180
    %p191 = scmp.eq.s32.totalorder %s19, 0
    %p192 = por %p190, %p191
    %p193 = scmp.ne.s32.totalorder %s179, %s180
    %p194 = scmp.eq.s32.totalorder %s20, 1
    %p195 = por %p193, %p194
    %p197 = scmp.ne.s32.totalorder %s180, %s196
    %p198 = scmp.eq.s32.totalorder %s20, 0
    %p199 = por %p197, %p198
    %p200 = scmp.le.s32.totalorder 1, %s14
    %p201 = scmp.lt.s32.totalorder %s14, 3
    %p202 = pnand %p200, %p201
    %p203 = pneg %p202
    // Predicated region
    $region9: #{tpu_custom_call.1} parent=5 // pred_check
      _
    $region10: #{tpu_custom_call.1} parent=5 // pred_check_branch
      %205 = sbr.rel (%p202) target = $region12
    $region11: #{tpu_custom_call.1} parent=5 // pred_region
      %s206 = ssub.s32 %s14, 1
      // Predicated region
      $region13: #{tpu_custom_call.1} parent=11 // pred_check
        %p207 = pneg %p61
      $region14: #{tpu_custom_call.1} parent=11 // pred_check_branch
        %209 = sbr.rel (%p207) target = $region16
      $region15: #{tpu_custom_call.1} parent=11 // pred_region
        _
      $region16: #{tpu_custom_call.1} parent=11 // pred_fallthru
        _
      // Predicated region
      $region17: #{tpu_custom_call.1} parent=11 // pred_check
        %p210 = pneg %p82
      $region18: #{tpu_custom_call.1} parent=11 // pred_check_branch
        %212 = sbr.rel (%p210) target = $region20
      $region19: #{tpu_custom_call.1} parent=11 // pred_region
        _
      $region20: #{tpu_custom_call.1} parent=11 // pred_fallthru
        _
      // Predicated region
      $region21: #{tpu_custom_call.1} parent=11 // pred_check
        %p213 = pneg %p103
      $region22: #{tpu_custom_call.1} parent=11 // pred_check_branch
        %215 = sbr.rel (%p213) target = $region24
      $region23: #{tpu_custom_call.1} parent=11 // pred_region
        _
      $region24: #{tpu_custom_call.1} parent=11 // pred_fallthru
        _
      // Predicated region
      $region25: #{tpu_custom_call.1} parent=11 // pred_check
        %p216 = pneg %p124
      $region26: #{tpu_custom_call.1} parent=11 // pred_check_branch
        %218 = sbr.rel (%p216) target = $region28
      $region27: #{tpu_custom_call.1} parent=11 // pred_region
        _
      $region28: #{tpu_custom_call.1} parent=11 // pred_fallthru
        _
      // Predicated region
      $region29: #{tpu_custom_call.1} parent=11 // pred_check
        %p219 = pneg %p145
      $region30: #{tpu_custom_call.1} parent=11 // pred_check_branch
        %221 = sbr.rel (%p219) target = $region32
      $region31: #{tpu_custom_call.1} parent=11 // pred_region
        _
      $region32: #{tpu_custom_call.1} parent=11 // pred_fallthru
        _
      // Predicated region
      $region33: #{tpu_custom_call.1} parent=11 // pred_check
        %p222 = pneg %p166
      $region34: #{tpu_custom_call.1} parent=11 // pred_check_branch
        %224 = sbr.rel (%p222) target = $region36
      $region35: #{tpu_custom_call.1} parent=11 // pred_region
        _
      $region36: #{tpu_custom_call.1} parent=11 // pred_fallthru
        _
    $region12: #{tpu_custom_call.1} parent=5 // pred_fallthru
      _
    %p225 = scmp.lt.s32.totalorder %s14, 2
    // Predicated region
    $region37: #{tpu_custom_call.1} parent=5 // pred_check
      %p226 = pneg %p225
    $region38: #{tpu_custom_call.1} parent=5 // pred_check_branch
      %228 = sbr.rel (%p226) target = $region40
    $region39: #{tpu_custom_call.1} parent=5 // pred_region
      // Predicated region
      $region41: #{tpu_custom_call.1} parent=39 // pred_check
        %p229 = pneg %p34
      $region42: #{tpu_custom_call.1} parent=39 // pred_check_branch
        %231 = sbr.rel (%p229) target = $region44
      $region43: #{tpu_custom_call.1} parent=39 // pred_region
        %s232 = smul.u32 64, %s14
        %p233 = scmp.lt.s32.totalorder %s232, 127
        %s234 = scalar_select %p233, %s232, 127
        %s235 = smul.addr %s234, 8
        %s236 = scalar_lea.vmem %s0, %s235
        %s237 = smul.u32 64, %s14
      $region44: #{tpu_custom_call.1} parent=39 // pred_fallthru
        _
    $region40: #{tpu_custom_call.1} parent=5 // pred_fallthru
      _
    %p238 = scmp.le.s32.totalorder 1, %s14
    %p239 = scmp.lt.s32.totalorder %s14, 3
    %p240 = pnand %p238, %p239
    %p241 = pneg %p240
    // Predicated region
    $region45: #{tpu_custom_call.1} parent=5 // pred_check
      _
    $region46: #{tpu_custom_call.1} parent=5 // pred_check_branch
      %243 = sbr.rel (%p240) target = $region48
    $region47: #{tpu_custom_call.1} parent=5 // pred_region
      %s244 = ssub.s32 %s14, 1
      %s245 = smul.u32 64, %s19
      %p246 = scmp.lt.s32.totalorder %s245, 127
      %s247 = scalar_select %p246, %s245, 127
      %s248 = smul.addr %s247, 8
      %s249 = scalar_lea.vmem %s0, %s248
      %p250 = pneg %p40
      %p251 = pneg %p37
      %p252 = pneg %p61
      %p253 = pneg %p58
      %p254 = pneg %p82
      %p255 = pneg %p79
      %p256 = pneg %p103
      %p257 = pneg %p100
      %p258 = pneg %p124
      %p259 = pneg %p121
      %p260 = pneg %p145
      %p261 = pneg %p142
      %p262 = pneg %p166
      %p263 = pneg %p163
      %p264 = pneg %p192
      %p265 = pneg %p189
      %s266 = smul.u32 64, %s19
      %p267 = scmp.lt.s32.totalorder %s266, 127
      %s268 = scalar_select %p267, %s266, 127
      %s269 = smul.addr %s268, 8
      %s270 = scalar_lea.vmem %s7, %s269
      %s271 = smul.u32 64, %s19
      %p272 = scmp.lt.s32.totalorder %s271, 127
      %s273 = scalar_select %p272, %s271, 127
      %s274 = smul.addr %s273, 8
      %s275 = scalar_lea.vmem %s0, %s274
      %s276 = smul.u32 64, %s19
      %s277 = smul.u32 64, %s19
      %p278 = scmp.lt.s32.totalorder %s277, 127
      %s279 = scalar_select %p278, %s277, 127
      %s280 = smul.addr %s279, 8
      %s281 = scalar_lea.vmem %s7, %s280
      %s282 = smul.u32 64, %s19
      %v284 = vld [vmem:[%s275] sm:$0xff]
      %v285 = vld [vmem:[%s275 + $0x8] sm:$0xff]
      %v286 = vld [vmem:[%s275 + $0x10] sm:$0xff]
      %v287 = vld [vmem:[%s275 + $0x18] sm:$0xff]
      %v288 = vld [vmem:[%s275 + $0x20] sm:$0xff]
      %v289 = vld [vmem:[%s275 + $0x28] sm:$0xff]
      %v290 = vld [vmem:[%s275 + $0x30] sm:$0xff]
      %v291 = vld [vmem:[%s275 + $0x38] sm:$0xff]
      %v292 = vld [vmem:[%s275 + $0x40] sm:$0xff]
      %v293 = vld [vmem:[%s275 + $0x48] sm:$0xff]
      %v294 = vld [vmem:[%s275 + $0x50] sm:$0xff]
      %v295 = vld [vmem:[%s275 + $0x58] sm:$0xff]
      %v296 = vld [vmem:[%s275 + $0x60] sm:$0xff]
      %v297 = vld [vmem:[%s275 + $0x68] sm:$0xff]
      %v298 = vld [vmem:[%s275 + $0x70] sm:$0xff]
      %v299 = vld [vmem:[%s275 + $0x78] sm:$0xff]
      %v300 = vld [vmem:[%s275 + $0x80] sm:$0xff]
      %v301 = vld [vmem:[%s275 + $0x88] sm:$0xff]
      %v302 = vld [vmem:[%s275 + $0x90] sm:$0xff]
      %v303 = vld [vmem:[%s275 + $0x98] sm:$0xff]
      %v304 = vld [vmem:[%s275 + $0xa0] sm:$0xff]
      %v305 = vld [vmem:[%s275 + $0xa8] sm:$0xff]
      %v306 = vld [vmem:[%s275 + $0xb0] sm:$0xff]
      %v307 = vld [vmem:[%s275 + $0xb8] sm:$0xff]
      %v308 = vld [vmem:[%s275 + $0xc0] sm:$0xff]
      %v309 = vld [vmem:[%s275 + $0xc8] sm:$0xff]
      %v310 = vld [vmem:[%s275 + $0xd0] sm:$0xff]
      %v311 = vld [vmem:[%s275 + $0xd8] sm:$0xff]
      %v312 = vld [vmem:[%s275 + $0xe0] sm:$0xff]
      %v313 = vld [vmem:[%s275 + $0xe8] sm:$0xff]
      %v314 = vld [vmem:[%s275 + $0xf0] sm:$0xff]
      %v315 = vld [vmem:[%s275 + $0xf8] sm:$0xff]
      %v316 = vld [vmem:[%s275 + $0x100] sm:$0xff]
      %v317 = vld [vmem:[%s275 + $0x108] sm:$0xff]
      %v318 = vld [vmem:[%s275 + $0x110] sm:$0xff]
      %v319 = vld [vmem:[%s275 + $0x118] sm:$0xff]
      %v320 = vld [vmem:[%s275 + $0x120] sm:$0xff]
      %v321 = vld [vmem:[%s275 + $0x128] sm:$0xff]
      %v322 = vld [vmem:[%s275 + $0x130] sm:$0xff]
      %v323 = vld [vmem:[%s275 + $0x138] sm:$0xff]
      %v324 = vld [vmem:[%s275 + $0x140] sm:$0xff]
      %v325 = vld [vmem:[%s275 + $0x148] sm:$0xff]
      %v326 = vld [vmem:[%s275 + $0x150] sm:$0xff]
      %v327 = vld [vmem:[%s275 + $0x158] sm:$0xff]
      %v328 = vld [vmem:[%s275 + $0x160] sm:$0xff]
      %v329 = vld [vmem:[%s275 + $0x168] sm:$0xff]
      %v330 = vld [vmem:[%s275 + $0x170] sm:$0xff]
      %v331 = vld [vmem:[%s275 + $0x178] sm:$0xff]
      %v332 = vld [vmem:[%s275 + $0x180] sm:$0xff]
      %v333 = vld [vmem:[%s275 + $0x188] sm:$0xff]
      %v334 = vld [vmem:[%s275 + $0x190] sm:$0xff]
      %v335 = vld [vmem:[%s275 + $0x198] sm:$0xff]
      %v336 = vld [vmem:[%s275 + $0x1a0] sm:$0xff]
      %v337 = vld [vmem:[%s275 + $0x1a8] sm:$0xff]
      %v338 = vld [vmem:[%s275 + $0x1b0] sm:$0xff]
      %v339 = vld [vmem:[%s275 + $0x1b8] sm:$0xff]
      %v340 = vld [vmem:[%s275 + $0x1c0] sm:$0xff]
      %v341 = vld [vmem:[%s275 + $0x1c8] sm:$0xff]
      %v342 = vld [vmem:[%s275 + $0x1d0] sm:$0xff]
      %v343 = vld [vmem:[%s275 + $0x1d8] sm:$0xff]
      %v344 = vld [vmem:[%s275 + $0x1e0] sm:$0xff]
      %v345 = vld [vmem:[%s275 + $0x1e8] sm:$0xff]
      %v346 = vld [vmem:[%s275 + $0x1f0] sm:$0xff]
      %v347 = vld [vmem:[%s275 + $0x1f8] sm:$0xff]
      %v348 = vpack.c.bf16 %v285, %v284
      %v349 = vpack.c.bf16 %v287, %v286
      %v350 = vpack.c.bf16 %v289, %v288
      %v351 = vpack.c.bf16 %v291, %v290
      %v352 = vpack.c.bf16 %v293, %v292
      %v353 = vpack.c.bf16 %v295, %v294
      %v354 = vpack.c.bf16 %v297, %v296
      %v355 = vpack.c.bf16 %v299, %v298
      %v356 = vpack.c.bf16 %v301, %v300
      %v357 = vpack.c.bf16 %v303, %v302
      %v358 = vpack.c.bf16 %v305, %v304
      %v359 = vpack.c.bf16 %v307, %v306
      %v360 = vpack.c.bf16 %v309, %v308
      %v361 = vpack.c.bf16 %v311, %v310
      %v362 = vpack.c.bf16 %v313, %v312
      %v363 = vpack.c.bf16 %v315, %v314
      %v364 = vpack.c.bf16 %v317, %v316
      %v365 = vpack.c.bf16 %v319, %v318
      %v366 = vpack.c.bf16 %v321, %v320
      %v367 = vpack.c.bf16 %v323, %v322
      %v368 = vpack.c.bf16 %v325, %v324
      %v369 = vpack.c.bf16 %v327, %v326
      %v370 = vpack.c.bf16 %v329, %v328
      %v371 = vpack.c.bf16 %v331, %v330
      %v372 = vpack.c.bf16 %v333, %v332
      %v373 = vpack.c.bf16 %v335, %v334
      %v374 = vpack.c.bf16 %v337, %v336
      %v375 = vpack.c.bf16 %v339, %v338
      %v376 = vpack.c.bf16 %v341, %v340
      %v377 = vpack.c.bf16 %v343, %v342
      %v378 = vpack.c.bf16 %v345, %v344
      %v379 = vpack.c.bf16 %v347, %v346
      %v380 = vld [vmem:[%s1] sm:$0xff]
      %v381 = vld [vmem:[%s1 + $0x8] sm:$0xff]
      %v382 = vld [vmem:[%s1 + $0x10] sm:$0xff]
      %v383 = vld [vmem:[%s1 + $0x18] sm:$0xff]
      %v388 = vunpack.c.l.b16 %v380
      %v389 = vunpack.c.h.b16 %v380
      %v390 = vunpack.c.l.b16 %v381
      %v391 = vunpack.c.h.b16 %v381
      %v392 = vunpack.c.l.b16 %v382
      %v393 = vunpack.c.h.b16 %v382
      %v394 = vunpack.c.l.b16 %v383
      %v395 = vunpack.c.h.b16 %v383
      %v396 = vpack.c.b16 %v390, %v388
      %v397 = vpack.c.b16 %v391, %v389
      %v398 = vpack.c.b16 %v394, %v392
      %v399 = vpack.c.b16 %v395, %v393
      %vm404 = vcmask 261120
      %v406 = vsel %vm404, %v348, 0
      %v409 = vsel %vm404, %v349, 0
      %v412 = vsel %vm404, %v350, 0
      %v415 = vsel %vm404, %v351, 0
      %v418 = vsel %vm404, %v352, 0
      %v421 = vsel %vm404, %v353, 0
      %v424 = vsel %vm404, %v354, 0
      %v427 = vsel %vm404, %v355, 0
      %v430 = vsel %vm404, %v356, 0
      %v433 = vsel %vm404, %v357, 0
      %v436 = vsel %vm404, %v358, 0
      %v439 = vsel %vm404, %v359, 0
      %v442 = vsel %vm404, %v360, 0
      %v445 = vsel %vm404, %v361, 0
      %v448 = vsel %vm404, %v362, 0
      %v451 = vsel %vm404, %v363, 0
      %v454 = vsel %vm404, %v364, 0
      %v457 = vsel %vm404, %v365, 0
      %v460 = vsel %vm404, %v366, 0
      %v463 = vsel %vm404, %v367, 0
      %v466 = vsel %vm404, %v368, 0
      %v469 = vsel %vm404, %v369, 0
      %v472 = vsel %vm404, %v370, 0
      %v475 = vsel %vm404, %v371, 0
      %v478 = vsel %vm404, %v372, 0
      %v481 = vsel %vm404, %v373, 0
      %v484 = vsel %vm404, %v374, 0
      %v487 = vsel %vm404, %v375, 0
      %v490 = vsel %vm404, %v376, 0
      %v493 = vsel %vm404, %v377, 0
      %v496 = vsel %vm404, %v378, 0
      %v499 = vsel %vm404, %v379, 0
      %501 = vmatprep.subr.bf16.mxu0 0
      %502 = vmatpush1.bf16.msra.mxu0 0
      %503 = vmatprep.subr.bf16.mxu0 0
      %504 = vmatpush1.bf16.msra.mxu0 0
      %505 = vmatprep.subr.bf16.mxu0 0
      %506 = vmatpush1.bf16.msra.mxu0 0
      %507 = vmatprep.subr.bf16.mxu0 0
      %508 = vmatpush1.bf16.msra.mxu0 0
      %509 = vmatprep.subr.bf16.mxu0 0
      %510 = vmatpush1.bf16.msra.mxu0 0
      %511 = vmatprep.subr.bf16.mxu0 0
      %512 = vmatpush1.bf16.msra.mxu0 0
      %513 = vmatprep.subr.bf16.mxu0 %v399
      %514 = vmatpush1.bf16.msra.mxu0 %v398
      %515 = vmatprep.subr.bf16.mxu0 %v397
      %516 = vmatpush1.bf16.msra.mxu0 %v396
      %517 = vmatprep.subr.bf16.mxu0 0
      %518 = vmatpush2.bf16.msra.mxu0 0
      %519 = vmatprep.subr.bf16.mxu0 0
      %520 = vmatpush2.bf16.msra.mxu0 0
      %521 = vmatprep.subr.bf16.mxu0 0
      %522 = vmatpush2.bf16.msra.mxu0 0
      %523 = vmatprep.subr.bf16.mxu0 0
      %524 = vmatpush2.bf16.msra.mxu0 0
      %525 = vmatprep.subr.bf16.mxu0 0
      %526 = vmatpush2.bf16.msra.mxu0 0
      %527 = vmatprep.subr.bf16.mxu0 0
      %528 = vmatpush2.bf16.msra.mxu0 0
      %529 = vmatprep.subr.bf16.mxu0 0
      %530 = vmatpush2.bf16.msra.mxu0 0
      %531 = vmatprep.subr.bf16.mxu0 0
      %532 = vmatpush2.bf16.msra.mxu0 0
      %533 = vmatprep.mubr.bf16.mxu0 0
      %534 = vmatmul.mubr.bf16.gmra.mxu0 %v406
      %v535 = vpop.f32.mrf.mxu0
      %v536 = vadd.f32 0.0, %v535
      %v537 = vpop.f32.mrf.mxu0
      %v538 = vadd.f32 0.0, %v537
      %v539 = vpop.f32.mrf.mxu0
      %v540 = vadd.f32 0.0, %v539
      %v541 = vpop.f32.mrf.mxu0
      %v542 = vadd.f32 0.0, %v541
      %543 = vmatprep.mubr.bf16.mxu0 0
      %544 = vmatmul.mubr.bf16.gmra.mxu0 %v409
      %v545 = vpop.f32.mrf.mxu0
      %v546 = vadd.f32 0.0, %v545
      %v547 = vpop.f32.mrf.mxu0
      %v548 = vadd.f32 0.0, %v547
      %v549 = vpop.f32.mrf.mxu0
      %v550 = vadd.f32 0.0, %v549
      %v551 = vpop.f32.mrf.mxu0
      %v552 = vadd.f32 0.0, %v551
      %553 = vmatprep.mubr.bf16.mxu0 0
      %554 = vmatmul.mubr.bf16.gmra.mxu0 %v412
      %v555 = vpop.f32.mrf.mxu0
      %v556 = vadd.f32 0.0, %v555
      %v557 = vpop.f32.mrf.mxu0
      %v558 = vadd.f32 0.0, %v557
      %v559 = vpop.f32.mrf.mxu0
      %v560 = vadd.f32 0.0, %v559
      %v561 = vpop.f32.mrf.mxu0
      %v562 = vadd.f32 0.0, %v561
      %563 = vmatprep.mubr.bf16.mxu0 0
      %564 = vmatmul.mubr.bf16.gmra.mxu0 %v415
      %v565 = vpop.f32.mrf.mxu0
      %v566 = vadd.f32 0.0, %v565
      %v567 = vpop.f32.mrf.mxu0
      %v568 = vadd.f32 0.0, %v567
      %v569 = vpop.f32.mrf.mxu0
      %v570 = vadd.f32 0.0, %v569
      %v571 = vpop.f32.mrf.mxu0
      %v572 = vadd.f32 0.0, %v571
      %573 = vmatprep.mubr.bf16.mxu0 0
      %574 = vmatmul.mubr.bf16.gmra.mxu0 %v418
      %v575 = vpop.f32.mrf.mxu0
      %v576 = vadd.f32 0.0, %v575
      %v577 = vpop.f32.mrf.mxu0
      %v578 = vadd.f32 0.0, %v577
      %v579 = vpop.f32.mrf.mxu0
      %v580 = vadd.f32 0.0, %v579
      %v581 = vpop.f32.mrf.mxu0
      %v582 = vadd.f32 0.0, %v581
      %583 = vmatprep.mubr.bf16.mxu0 0
      %584 = vmatmul.mubr.bf16.gmra.mxu0 %v421
      %v585 = vpop.f32.mrf.mxu0
      %v586 = vadd.f32 0.0, %v585
      %v587 = vpop.f32.mrf.mxu0
      %v588 = vadd.f32 0.0, %v587
      %v589 = vpop.f32.mrf.mxu0
      %v590 = vadd.f32 0.0, %v589
      %v591 = vpop.f32.mrf.mxu0
      %v592 = vadd.f32 0.0, %v591
      %593 = vmatprep.mubr.bf16.mxu0 0
      %594 = vmatmul.mubr.bf16.gmra.mxu0 %v424
      %v595 = vpop.f32.mrf.mxu0
      %v596 = vadd.f32 0.0, %v595
      %v597 = vpop.f32.mrf.mxu0
      %v598 = vadd.f32 0.0, %v597
      %v599 = vpop.f32.mrf.mxu0
      %v600 = vadd.f32 0.0, %v599
      %v601 = vpop.f32.mrf.mxu0
      %v602 = vadd.f32 0.0, %v601
      %603 = vmatprep.mubr.bf16.mxu0 0
      %604 = vmatmul.mubr.bf16.gmra.mxu0 %v427
      %v605 = vpop.f32.mrf.mxu0
      %v606 = vadd.f32 0.0, %v605
      %v607 = vpop.f32.mrf.mxu0
      %v608 = vadd.f32 0.0, %v607
      %v609 = vpop.f32.mrf.mxu0
      %v610 = vadd.f32 0.0, %v609
      %v611 = vpop.f32.mrf.mxu0
      %v612 = vadd.f32 0.0, %v611
      %613 = vmatprep.mubr.bf16.mxu0 0
      %614 = vmatmul.mubr.bf16.gmra.mxu0 %v430
      %v615 = vpop.f32.mrf.mxu0
      %v616 = vadd.f32 0.0, %v615
      %v617 = vpop.f32.mrf.mxu0
      %v618 = vadd.f32 0.0, %v617
      %v619 = vpop.f32.mrf.mxu0
      %v620 = vadd.f32 0.0, %v619
      %v621 = vpop.f32.mrf.mxu0
      %v622 = vadd.f32 0.0, %v621
      %623 = vmatprep.mubr.bf16.mxu0 0
      %624 = vmatmul.mubr.bf16.gmra.mxu0 %v433
      %v625 = vpop.f32.mrf.mxu0
      %v626 = vadd.f32 0.0, %v625
      %v627 = vpop.f32.mrf.mxu0
      %v628 = vadd.f32 0.0, %v627
      %v629 = vpop.f32.mrf.mxu0
      %v630 = vadd.f32 0.0, %v629
      %v631 = vpop.f32.mrf.mxu0
      %v632 = vadd.f32 0.0, %v631
      %633 = vmatprep.mubr.bf16.mxu0 0
      %634 = vmatmul.mubr.bf16.gmra.mxu0 %v436
      %v635 = vpop.f32.mrf.mxu0
      %v636 = vadd.f32 0.0, %v635
      %v637 = vpop.f32.mrf.mxu0
      %v638 = vadd.f32 0.0, %v637
      %v639 = vpop.f32.mrf.mxu0
      %v640 = vadd.f32 0.0, %v639
      %v641 = vpop.f32.mrf.mxu0
      %v642 = vadd.f32 0.0, %v641
      %643 = vmatprep.mubr.bf16.mxu0 0
      %644 = vmatmul.mubr.bf16.gmra.mxu0 %v439
      %v645 = vpop.f32.mrf.mxu0
      %v646 = vadd.f32 0.0, %v645
      %v647 = vpop.f32.mrf.mxu0
      %v648 = vadd.f32 0.0, %v647
      %v649 = vpop.f32.mrf.mxu0
      %v650 = vadd.f32 0.0, %v649
      %v651 = vpop.f32.mrf.mxu0
      %v652 = vadd.f32 0.0, %v651
      %653 = vmatprep.mubr.bf16.mxu0 0
      %654 = vmatmul.mubr.bf16.gmra.mxu0 %v442
      %v655 = vpop.f32.mrf.mxu0
      %v656 = vadd.f32 0.0, %v655
      %v657 = vpop.f32.mrf.mxu0
      %v658 = vadd.f32 0.0, %v657
      %v659 = vpop.f32.mrf.mxu0
      %v660 = vadd.f32 0.0, %v659
      %v661 = vpop.f32.mrf.mxu0
      %v662 = vadd.f32 0.0, %v661
      %663 = vmatprep.mubr.bf16.mxu0 0
      %664 = vmatmul.mubr.bf16.gmra.mxu0 %v445
      %v665 = vpop.f32.mrf.mxu0
      %v666 = vadd.f32 0.0, %v665
      %v667 = vpop.f32.mrf.mxu0
      %v668 = vadd.f32 0.0, %v667
      %v669 = vpop.f32.mrf.mxu0
      %v670 = vadd.f32 0.0, %v669
      %v671 = vpop.f32.mrf.mxu0
      %v672 = vadd.f32 0.0, %v671
      %673 = vmatprep.mubr.bf16.mxu0 0
      %674 = vmatmul.mubr.bf16.gmra.mxu0 %v448
      %v675 = vpop.f32.mrf.mxu0
      %v676 = vadd.f32 0.0, %v675
      %v677 = vpop.f32.mrf.mxu0
      %v678 = vadd.f32 0.0, %v677
      %v679 = vpop.f32.mrf.mxu0
      %v680 = vadd.f32 0.0, %v679
      %v681 = vpop.f32.mrf.mxu0
      %v682 = vadd.f32 0.0, %v681
      %683 = vmatprep.mubr.bf16.mxu0 0
      %684 = vmatmul.mubr.bf16.gmra.mxu0 %v451
      %v685 = vpop.f32.mrf.mxu0
      %v686 = vadd.f32 0.0, %v685
      %v687 = vpop.f32.mrf.mxu0
      %v688 = vadd.f32 0.0, %v687
      %v689 = vpop.f32.mrf.mxu0
      %v690 = vadd.f32 0.0, %v689
      %v691 = vpop.f32.mrf.mxu0
      %v692 = vadd.f32 0.0, %v691
      %693 = vmatprep.mubr.bf16.mxu0 0
      %694 = vmatmul.mubr.bf16.gmra.mxu0 %v454
      %v695 = vpop.f32.mrf.mxu0
      %v696 = vadd.f32 0.0, %v695
      %v697 = vpop.f32.mrf.mxu0
      %v698 = vadd.f32 0.0, %v697
      %v699 = vpop.f32.mrf.mxu0
      %v700 = vadd.f32 0.0, %v699
      %v701 = vpop.f32.mrf.mxu0
      %v702 = vadd.f32 0.0, %v701
      %703 = vmatprep.mubr.bf16.mxu0 0
      %704 = vmatmul.mubr.bf16.gmra.mxu0 %v457
      %v705 = vpop.f32.mrf.mxu0
      %v706 = vadd.f32 0.0, %v705
      %v707 = vpop.f32.mrf.mxu0
      %v708 = vadd.f32 0.0, %v707
      %v709 = vpop.f32.mrf.mxu0
      %v710 = vadd.f32 0.0, %v709
      %v711 = vpop.f32.mrf.mxu0
      %v712 = vadd.f32 0.0, %v711
      %713 = vmatprep.mubr.bf16.mxu0 0
      %714 = vmatmul.mubr.bf16.gmra.mxu0 %v460
      %v715 = vpop.f32.mrf.mxu0
      %v716 = vadd.f32 0.0, %v715
      %v717 = vpop.f32.mrf.mxu0
      %v718 = vadd.f32 0.0, %v717
      %v719 = vpop.f32.mrf.mxu0
      %v720 = vadd.f32 0.0, %v719
      %v721 = vpop.f32.mrf.mxu0
      %v722 = vadd.f32 0.0, %v721
      %723 = vmatprep.mubr.bf16.mxu0 0
      %724 = vmatmul.mubr.bf16.gmra.mxu0 %v463
      %v725 = vpop.f32.mrf.mxu0
      %v726 = vadd.f32 0.0, %v725
      %v727 = vpop.f32.mrf.mxu0
      %v728 = vadd.f32 0.0, %v727
      %v729 = vpop.f32.mrf.mxu0
      %v730 = vadd.f32 0.0, %v729
      %v731 = vpop.f32.mrf.mxu0
      %v732 = vadd.f32 0.0, %v731
      %733 = vmatprep.mubr.bf16.mxu0 0
      %734 = vmatmul.mubr.bf16.gmra.mxu0 %v466
      %v735 = vpop.f32.mrf.mxu0
      %v736 = vadd.f32 0.0, %v735
      %v737 = vpop.f32.mrf.mxu0
      %v738 = vadd.f32 0.0, %v737
      %v739 = vpop.f32.mrf.mxu0
      %v740 = vadd.f32 0.0, %v739
      %v741 = vpop.f32.mrf.mxu0
      %v742 = vadd.f32 0.0, %v741
      %743 = vmatprep.mubr.bf16.mxu0 0
      %744 = vmatmul.mubr.bf16.gmra.mxu0 %v469
      %v745 = vpop.f32.mrf.mxu0
      %v746 = vadd.f32 0.0, %v745
      %v747 = vpop.f32.mrf.mxu0
      %v748 = vadd.f32 0.0, %v747
      %v749 = vpop.f32.mrf.mxu0
      %v750 = vadd.f32 0.0, %v749
      %v751 = vpop.f32.mrf.mxu0
      %v752 = vadd.f32 0.0, %v751
      %753 = vmatprep.mubr.bf16.mxu0 0
      %754 = vmatmul.mubr.bf16.gmra.mxu0 %v472
      %v755 = vpop.f32.mrf.mxu0
      %v756 = vadd.f32 0.0, %v755
      %v757 = vpop.f32.mrf.mxu0
      %v758 = vadd.f32 0.0, %v757
      %v759 = vpop.f32.mrf.mxu0
      %v760 = vadd.f32 0.0, %v759
      %v761 = vpop.f32.mrf.mxu0
      %v762 = vadd.f32 0.0, %v761
      %763 = vmatprep.mubr.bf16.mxu0 0
      %764 = vmatmul.mubr.bf16.gmra.mxu0 %v475
      %v765 = vpop.f32.mrf.mxu0
      %v766 = vadd.f32 0.0, %v765
      %v767 = vpop.f32.mrf.mxu0
      %v768 = vadd.f32 0.0, %v767
      %v769 = vpop.f32.mrf.mxu0
      %v770 = vadd.f32 0.0, %v769
      %v771 = vpop.f32.mrf.mxu0
      %v772 = vadd.f32 0.0, %v771
      %773 = vmatprep.mubr.bf16.mxu0 0
      %774 = vmatmul.mubr.bf16.gmra.mxu0 %v478
      %v775 = vpop.f32.mrf.mxu0
      %v776 = vadd.f32 0.0, %v775
      %v777 = vpop.f32.mrf.mxu0
      %v778 = vadd.f32 0.0, %v777
      %v779 = vpop.f32.mrf.mxu0
      %v780 = vadd.f32 0.0, %v779
      %v781 = vpop.f32.mrf.mxu0
      %v782 = vadd.f32 0.0, %v781
      %783 = vmatprep.mubr.bf16.mxu0 0
      %784 = vmatmul.mubr.bf16.gmra.mxu0 %v481
      %v785 = vpop.f32.mrf.mxu0
      %v786 = vadd.f32 0.0, %v785
      %v787 = vpop.f32.mrf.mxu0
      %v788 = vadd.f32 0.0, %v787
      %v789 = vpop.f32.mrf.mxu0
      %v790 = vadd.f32 0.0, %v789
      %v791 = vpop.f32.mrf.mxu0
      %v792 = vadd.f32 0.0, %v791
      %793 = vmatprep.mubr.bf16.mxu0 0
      %794 = vmatmul.mubr.bf16.gmra.mxu0 %v484
      %v795 = vpop.f32.mrf.mxu0
      %v796 = vadd.f32 0.0, %v795
      %v797 = vpop.f32.mrf.mxu0
      %v798 = vadd.f32 0.0, %v797
      %v799 = vpop.f32.mrf.mxu0
      %v800 = vadd.f32 0.0, %v799
      %v801 = vpop.f32.mrf.mxu0
      %v802 = vadd.f32 0.0, %v801
      %803 = vmatprep.mubr.bf16.mxu0 0
      %804 = vmatmul.mubr.bf16.gmra.mxu0 %v487
      %v805 = vpop.f32.mrf.mxu0
      %v806 = vadd.f32 0.0, %v805
      %v807 = vpop.f32.mrf.mxu0
      %v808 = vadd.f32 0.0, %v807
      %v809 = vpop.f32.mrf.mxu0
      %v810 = vadd.f32 0.0, %v809
      %v811 = vpop.f32.mrf.mxu0
      %v812 = vadd.f32 0.0, %v811
      %813 = vmatprep.mubr.bf16.mxu0 0
      %814 = vmatmul.mubr.bf16.gmra.mxu0 %v490
      %v815 = vpop.f32.mrf.mxu0
      %v816 = vadd.f32 0.0, %v815
      %v817 = vpop.f32.mrf.mxu0
      %v818 = vadd.f32 0.0, %v817
      %v819 = vpop.f32.mrf.mxu0
      %v820 = vadd.f32 0.0, %v819
      %v821 = vpop.f32.mrf.mxu0
      %v822 = vadd.f32 0.0, %v821
      %823 = vmatprep.mubr.bf16.mxu0 0
      %824 = vmatmul.mubr.bf16.gmra.mxu0 %v493
      %v825 = vpop.f32.mrf.mxu0
      %v826 = vadd.f32 0.0, %v825
      %v827 = vpop.f32.mrf.mxu0
      %v828 = vadd.f32 0.0, %v827
      %v829 = vpop.f32.mrf.mxu0
      %v830 = vadd.f32 0.0, %v829
      %v831 = vpop.f32.mrf.mxu0
      %v832 = vadd.f32 0.0, %v831
      %833 = vmatprep.mubr.bf16.mxu0 0
      %834 = vmatmul.mubr.bf16.gmra.mxu0 %v496
      %v835 = vpop.f32.mrf.mxu0
      %v836 = vadd.f32 0.0, %v835
      %v837 = vpop.f32.mrf.mxu0
      %v838 = vadd.f32 0.0, %v837
      %v839 = vpop.f32.mrf.mxu0
      %v840 = vadd.f32 0.0, %v839
      %v841 = vpop.f32.mrf.mxu0
      %v842 = vadd.f32 0.0, %v841
      %843 = vmatprep.mubr.bf16.mxu0 0
      %844 = vmatmul.mubr.bf16.gmra.mxu0 %v499
      %v845 = vpop.f32.mrf.mxu0
      %v846 = vadd.f32 0.0, %v845
      %v847 = vpop.f32.mrf.mxu0
      %v848 = vadd.f32 0.0, %v847
      %v849 = vpop.f32.mrf.mxu0
      %v850 = vadd.f32 0.0, %v849
      %v851 = vpop.f32.mrf.mxu0
      %v852 = vadd.f32 0.0, %v851
      %853 = vdwg.mxu0
      %v854 = vpack.c.bf16 %v540, %v536
      %v855 = vpack.c.bf16 %v542, %v538
      %v856 = vpack.c.bf16 %v550, %v546
      %v857 = vpack.c.bf16 %v552, %v548
      %v858 = vpack.c.bf16 %v560, %v556
      %v859 = vpack.c.bf16 %v562, %v558
      %v860 = vpack.c.bf16 %v570, %v566
      %v861 = vpack.c.bf16 %v572, %v568
      %v862 = vpack.c.bf16 %v580, %v576
      %v863 = vpack.c.bf16 %v582, %v578
      %v864 = vpack.c.bf16 %v590, %v586
      %v865 = vpack.c.bf16 %v592, %v588
      %v866 = vpack.c.bf16 %v600, %v596
      %v867 = vpack.c.bf16 %v602, %v598
      %v868 = vpack.c.bf16 %v610, %v606
      %v869 = vpack.c.bf16 %v612, %v608
      %v870 = vpack.c.bf16 %v620, %v616
      %v871 = vpack.c.bf16 %v622, %v618
      %v872 = vpack.c.bf16 %v630, %v626
      %v873 = vpack.c.bf16 %v632, %v628
      %v874 = vpack.c.bf16 %v640, %v636
      %v875 = vpack.c.bf16 %v642, %v638
      %v876 = vpack.c.bf16 %v650, %v646
      %v877 = vpack.c.bf16 %v652, %v648
      %v878 = vpack.c.bf16 %v660, %v656
      %v879 = vpack.c.bf16 %v662, %v658
      %v880 = vpack.c.bf16 %v670, %v666
      %v881 = vpack.c.bf16 %v672, %v668
      %v882 = vpack.c.bf16 %v680, %v676
      %v883 = vpack.c.bf16 %v682, %v678
      %v884 = vpack.c.bf16 %v690, %v686
      %v885 = vpack.c.bf16 %v692, %v688
      %v886 = vpack.c.bf16 %v700, %v696
      %v887 = vpack.c.bf16 %v702, %v698
      %v888 = vpack.c.bf16 %v710, %v706
      %v889 = vpack.c.bf16 %v712, %v708
      %v890 = vpack.c.bf16 %v720, %v716
      %v891 = vpack.c.bf16 %v722, %v718
      %v892 = vpack.c.bf16 %v730, %v726
      %v893 = vpack.c.bf16 %v732, %v728
      %v894 = vpack.c.bf16 %v740, %v736
      %v895 = vpack.c.bf16 %v742, %v738
      %v896 = vpack.c.bf16 %v750, %v746
      %v897 = vpack.c.bf16 %v752, %v748
      %v898 = vpack.c.bf16 %v760, %v756
      %v899 = vpack.c.bf16 %v762, %v758
      %v900 = vpack.c.bf16 %v770, %v766
      %v901 = vpack.c.bf16 %v772, %v768
      %v902 = vpack.c.bf16 %v780, %v776
      %v903 = vpack.c.bf16 %v782, %v778
      %v904 = vpack.c.bf16 %v790, %v786
      %v905 = vpack.c.bf16 %v792, %v788
      %v906 = vpack.c.bf16 %v800, %v796
      %v907 = vpack.c.bf16 %v802, %v798
      %v908 = vpack.c.bf16 %v810, %v806
      %v909 = vpack.c.bf16 %v812, %v808
      %v910 = vpack.c.bf16 %v820, %v816
      %v911 = vpack.c.bf16 %v822, %v818
      %v912 = vpack.c.bf16 %v830, %v826
      %v913 = vpack.c.bf16 %v832, %v828
      %v914 = vpack.c.bf16 %v840, %v836
      %v915 = vpack.c.bf16 %v842, %v838
      %v916 = vpack.c.bf16 %v850, %v846
      %v917 = vpack.c.bf16 %v852, %v848
      %v918 = vld [vmem:[%s2] sm:$0x3]
      %v921 = vunpack.c.l.s4 1966171168
      %v922 = vunpack.c.0.s8 %v921
      %v923 = vlaneseq
      %v924 = vshrl.u32 %v923, 7
      %v925 = vsub.s32 %v922, %v924
      %v926 = vrot.slane %v918, %v925
      %v927 = vcombine.high %v926, %v926
      %v929 = vunpack.c.l.s4 1966171168
      %v930 = vunpack.c.0.s8 %v929
      %v931 = vlaneseq
      %v932 = vshrl.u32 %v931, 7
      %v933 = vsub.s32 %v930, %v932
      %v934 = vrot.slane %v926, %v933
      %v936 = vunpack.c.l.s4 1966171168
      %v937 = vunpack.c.0.s8 %v936
      %v938 = vlaneseq
      %v939 = vshrl.u32 %v938, 7
      %v940 = vsub.s32 %v937, %v939
      %v941 = vrot.slane %v927, %v940
      %v943 = vpack.i.b16 %v934, %v934
      %v945 = vlaneseq
      %v946 = vshrl.u32 %v945, 7
      %v947 = vsub.s32 0, %v946
      %v948 = vrot.slane %v943, %v947
      %v950 = vpack.i.b16 %v941, %v941
      %v952 = vlaneseq
      %v953 = vshrl.u32 %v952, 7
      %v954 = vsub.s32 0, %v953
      %v955 = vrot.slane %v950, %v954
      %v956 = vadd.bf16 %v854, %v948
      %v957 = vadd.bf16 %v855, %v955
      %v958 = vadd.bf16 %v856, %v948
      %v959 = vadd.bf16 %v857, %v955
      %v960 = vadd.bf16 %v858, %v948
      %v961 = vadd.bf16 %v859, %v955
      %v962 = vadd.bf16 %v860, %v948
      %v963 = vadd.bf16 %v861, %v955
      %v964 = vadd.bf16 %v862, %v948
      %v965 = vadd.bf16 %v863, %v955
      %v966 = vadd.bf16 %v864, %v948
      %v967 = vadd.bf16 %v865, %v955
      %v968 = vadd.bf16 %v866, %v948
      %v969 = vadd.bf16 %v867, %v955
      %v970 = vadd.bf16 %v868, %v948
      %v971 = vadd.bf16 %v869, %v955
      %v972 = vadd.bf16 %v870, %v948
      %v973 = vadd.bf16 %v871, %v955
      %v974 = vadd.bf16 %v872, %v948
      %v975 = vadd.bf16 %v873, %v955
      %v976 = vadd.bf16 %v874, %v948
      %v977 = vadd.bf16 %v875, %v955
      %v978 = vadd.bf16 %v876, %v948
      %v979 = vadd.bf16 %v877, %v955
      %v980 = vadd.bf16 %v878, %v948
      %v981 = vadd.bf16 %v879, %v955
      %v982 = vadd.bf16 %v880, %v948
      %v983 = vadd.bf16 %v881, %v955
      %v984 = vadd.bf16 %v882, %v948
      %v985 = vadd.bf16 %v883, %v955
      %v986 = vadd.bf16 %v884, %v948
      %v987 = vadd.bf16 %v885, %v955
      %v988 = vadd.bf16 %v886, %v948
      %v989 = vadd.bf16 %v887, %v955
      %v990 = vadd.bf16 %v888, %v948
      %v991 = vadd.bf16 %v889, %v955
      %v992 = vadd.bf16 %v890, %v948
      %v993 = vadd.bf16 %v891, %v955
      %v994 = vadd.bf16 %v892, %v948
      %v995 = vadd.bf16 %v893, %v955
      %v996 = vadd.bf16 %v894, %v948
      %v997 = vadd.bf16 %v895, %v955
      %v998 = vadd.bf16 %v896, %v948
      %v999 = vadd.bf16 %v897, %v955
      %v1000 = vadd.bf16 %v898, %v948
      %v1001 = vadd.bf16 %v899, %v955
      %v1002 = vadd.bf16 %v900, %v948
      %v1003 = vadd.bf16 %v901, %v955
      %v1004 = vadd.bf16 %v902, %v948
      %v1005 = vadd.bf16 %v903, %v955
      %v1006 = vadd.bf16 %v904, %v948
      %v1007 = vadd.bf16 %v905, %v955
      %v1008 = vadd.bf16 %v906, %v948
      %v1009 = vadd.bf16 %v907, %v955
      %v1010 = vadd.bf16 %v908, %v948
      %v1011 = vadd.bf16 %v909, %v955
      %v1012 = vadd.bf16 %v910, %v948
      %v1013 = vadd.bf16 %v911, %v955
      %v1014 = vadd.bf16 %v912, %v948
      %v1015 = vadd.bf16 %v913, %v955
      %v1016 = vadd.bf16 %v914, %v948
      %v1017 = vadd.bf16 %v915, %v955
      %v1018 = vadd.bf16 %v916, %v948
      %v1019 = vadd.bf16 %v917, %v955
      %v1020 = vmax.bf16 %v956, 0
      %v1021 = vmax.bf16 %v957, 0
      %v1022 = vmax.bf16 %v958, 0
      %v1023 = vmax.bf16 %v959, 0
      %v1024 = vmax.bf16 %v960, 0
      %v1025 = vmax.bf16 %v961, 0
      %v1026 = vmax.bf16 %v962, 0
      %v1027 = vmax.bf16 %v963, 0
      %v1028 = vmax.bf16 %v964, 0
      %v1029 = vmax.bf16 %v965, 0
      %v1030 = vmax.bf16 %v966, 0
      %v1031 = vmax.bf16 %v967, 0
      %v1032 = vmax.bf16 %v968, 0
      %v1033 = vmax.bf16 %v969, 0
      %v1034 = vmax.bf16 %v970, 0
      %v1035 = vmax.bf16 %v971, 0
      %v1036 = vmax.bf16 %v972, 0
      %v1037 = vmax.bf16 %v973, 0
      %v1038 = vmax.bf16 %v974, 0
      %v1039 = vmax.bf16 %v975, 0
      %v1040 = vmax.bf16 %v976, 0
      %v1041 = vmax.bf16 %v977, 0
      %v1042 = vmax.bf16 %v978, 0
      %v1043 = vmax.bf16 %v979, 0
      %v1044 = vmax.bf16 %v980, 0
      %v1045 = vmax.bf16 %v981, 0
      %v1046 = vmax.bf16 %v982, 0
      %v1047 = vmax.bf16 %v983, 0
      %v1048 = vmax.bf16 %v984, 0
      %v1049 = vmax.bf16 %v985, 0
      %v1050 = vmax.bf16 %v986, 0
      %v1051 = vmax.bf16 %v987, 0
      %v1052 = vmax.bf16 %v988, 0
      %v1053 = vmax.bf16 %v989, 0
      %v1054 = vmax.bf16 %v990, 0
      %v1055 = vmax.bf16 %v991, 0
      %v1056 = vmax.bf16 %v992, 0
      %v1057 = vmax.bf16 %v993, 0
      %v1058 = vmax.bf16 %v994, 0
      %v1059 = vmax.bf16 %v995, 0
      %v1060 = vmax.bf16 %v996, 0
      %v1061 = vmax.bf16 %v997, 0
      %v1062 = vmax.bf16 %v998, 0
      %v1063 = vmax.bf16 %v999, 0
      %v1064 = vmax.bf16 %v1000, 0
      %v1065 = vmax.bf16 %v1001, 0
      %v1066 = vmax.bf16 %v1002, 0
      %v1067 = vmax.bf16 %v1003, 0
      %v1068 = vmax.bf16 %v1004, 0
      %v1069 = vmax.bf16 %v1005, 0
      %v1070 = vmax.bf16 %v1006, 0
      %v1071 = vmax.bf16 %v1007, 0
      %v1072 = vmax.bf16 %v1008, 0
      %v1073 = vmax.bf16 %v1009, 0
      %v1074 = vmax.bf16 %v1010, 0
      %v1075 = vmax.bf16 %v1011, 0
      %v1076 = vmax.bf16 %v1012, 0
      %v1077 = vmax.bf16 %v1013, 0
      %v1078 = vmax.bf16 %v1014, 0
      %v1079 = vmax.bf16 %v1015, 0
      %v1080 = vmax.bf16 %v1016, 0
      %v1081 = vmax.bf16 %v1017, 0
      %v1082 = vmax.bf16 %v1018, 0
      %v1083 = vmax.bf16 %v1019, 0
      %v1084 = vld [vmem:[%s3] sm:$0xf]
      %v1085 = vld [vmem:[%s3 + $0x4] sm:$0xf]
      %v1086 = vld [vmem:[%s3 + $0x8] sm:$0xf]
      %v1087 = vld [vmem:[%s3 + $0xc] sm:$0xf]
      %v1088 = vld [vmem:[%s3 + $0x10] sm:$0xf]
      %v1089 = vld [vmem:[%s3 + $0x14] sm:$0xf]
      %v1090 = vld [vmem:[%s3 + $0x18] sm:$0xf]
      %v1091 = vld [vmem:[%s3 + $0x1c] sm:$0xf]
      %v1092 = vld [vmem:[%s3 + $0x20] sm:$0xf]
      %v1093 = vld [vmem:[%s3 + $0x24] sm:$0xf]
      %v1094 = vld [vmem:[%s3 + $0x28] sm:$0xf]
      %v1095 = vld [vmem:[%s3 + $0x2c] sm:$0xf]
      %v1096 = vld [vmem:[%s3 + $0x30] sm:$0xf]
      %v1097 = vld [vmem:[%s3 + $0x34] sm:$0xf]
      %v1098 = vld [vmem:[%s3 + $0x38] sm:$0xf]
      %v1099 = vld [vmem:[%s3 + $0x3c] sm:$0xf]
      %v1100 = vld [vmem:[%s3 + $0x40] sm:$0xf]
      %v1101 = vld [vmem:[%s3 + $0x44] sm:$0xf]
      %v1102 = vld [vmem:[%s3 + $0x48] sm:$0xf]
      %v1103 = vld [vmem:[%s3 + $0x4c] sm:$0xf]
      %v1104 = vld [vmem:[%s3 + $0x50] sm:$0xf]
      %v1105 = vld [vmem:[%s3 + $0x54] sm:$0xf]
      %v1106 = vld [vmem:[%s3 + $0x58] sm:$0xf]
      %v1107 = vld [vmem:[%s3 + $0x5c] sm:$0xf]
      %v1108 = vld [vmem:[%s3 + $0x60] sm:$0xf]
      %v1109 = vld [vmem:[%s3 + $0x64] sm:$0xf]
      %v1110 = vld [vmem:[%s3 + $0x68] sm:$0xf]
      %v1111 = vld [vmem:[%s3 + $0x6c] sm:$0xf]
      %v1112 = vld [vmem:[%s3 + $0x70] sm:$0xf]
      %v1113 = vld [vmem:[%s3 + $0x74] sm:$0xf]
      %v1114 = vld [vmem:[%s3 + $0x78] sm:$0xf]
      %v1115 = vld [vmem:[%s3 + $0x7c] sm:$0xf]
      %v1116 = vld [vmem:[%s4] sm:$0x1]
      %v1118 = vlaneseq
      %v1119 = vshrl.u32 %v1118, 7
      %v1120 = vsub.s32 0, %v1119
      %v1121 = vrot.slane %v1116, %v1120
      %v1155 = vunpack.c.l.b16 %v1084
      %v1156 = vunpack.c.l.b16 %v1085
      %v1157 = vunpack.c.l.b16 %v1086
      %v1158 = vunpack.c.l.b16 %v1087
      %v1159 = vunpack.c.l.b16 %v1088
      %v1160 = vunpack.c.l.b16 %v1089
      %v1161 = vunpack.c.l.b16 %v1090
      %v1162 = vunpack.c.l.b16 %v1091
      %v1163 = vunpack.c.l.b16 %v1092
      %v1164 = vunpack.c.l.b16 %v1093
      %v1165 = vunpack.c.l.b16 %v1094
      %v1166 = vunpack.c.l.b16 %v1095
      %v1167 = vunpack.c.l.b16 %v1096
      %v1168 = vunpack.c.l.b16 %v1097
      %v1169 = vunpack.c.l.b16 %v1098
      %v1170 = vunpack.c.l.b16 %v1099
      %v1171 = vunpack.c.l.b16 %v1100
      %v1172 = vunpack.c.l.b16 %v1101
      %v1173 = vunpack.c.l.b16 %v1102
      %v1174 = vunpack.c.l.b16 %v1103
      %v1175 = vunpack.c.l.b16 %v1104
      %v1176 = vunpack.c.l.b16 %v1105
      %v1177 = vunpack.c.l.b16 %v1106
      %v1178 = vunpack.c.l.b16 %v1107
      %v1179 = vunpack.c.l.b16 %v1108
      %v1180 = vunpack.c.l.b16 %v1109
      %v1181 = vunpack.c.l.b16 %v1110
      %v1182 = vunpack.c.l.b16 %v1111
      %v1183 = vunpack.c.l.b16 %v1112
      %v1184 = vunpack.c.l.b16 %v1113
      %v1185 = vunpack.c.l.b16 %v1114
      %v1186 = vunpack.c.l.b16 %v1115
      %v1187 = vpack.c.b16 %v1156, %v1155
      %v1188 = vpack.c.b16 %v1158, %v1157
      %v1189 = vpack.c.b16 %v1160, %v1159
      %v1190 = vpack.c.b16 %v1162, %v1161
      %v1191 = vpack.c.b16 %v1164, %v1163
      %v1192 = vpack.c.b16 %v1166, %v1165
      %v1193 = vpack.c.b16 %v1168, %v1167
      %v1194 = vpack.c.b16 %v1170, %v1169
      %v1195 = vpack.c.b16 %v1172, %v1171
      %v1196 = vpack.c.b16 %v1174, %v1173
      %v1197 = vpack.c.b16 %v1176, %v1175
      %v1198 = vpack.c.b16 %v1178, %v1177
      %v1199 = vpack.c.b16 %v1180, %v1179
      %v1200 = vpack.c.b16 %v1182, %v1181
      %v1201 = vpack.c.b16 %v1184, %v1183
      %v1202 = vpack.c.b16 %v1186, %v1185
      %1219 = vmatprep.subr.bf16.mxu0 0
      %1220 = vmatpush1.bf16.msra.mxu0 %v1194
      %1221 = vmatprep.subr.bf16.mxu0 0
      %1222 = vmatpush1.bf16.msra.mxu0 %v1193
      %1223 = vmatprep.subr.bf16.mxu0 0
      %1224 = vmatpush1.bf16.msra.mxu0 %v1192
      %1225 = vmatprep.subr.bf16.mxu0 0
      %1226 = vmatpush1.bf16.msra.mxu0 %v1191
      %1227 = vmatprep.subr.bf16.mxu0 0
      %1228 = vmatpush1.bf16.msra.mxu0 %v1190
      %1229 = vmatprep.subr.bf16.mxu0 0
      %1230 = vmatpush1.bf16.msra.mxu0 %v1189
      %1231 = vmatprep.subr.bf16.mxu0 0
      %1232 = vmatpush1.bf16.msra.mxu0 %v1188
      %1233 = vmatprep.subr.bf16.mxu0 0
      %1234 = vmatpush1.bf16.msra.mxu0 %v1187
      %1235 = vmatprep.subr.bf16.mxu0 0
      %1236 = vmatpush2.bf16.msra.mxu0 %v1202
      %1237 = vmatprep.subr.bf16.mxu0 0
      %1238 = vmatpush2.bf16.msra.mxu0 %v1201
      %1239 = vmatprep.subr.bf16.mxu0 0
      %1240 = vmatpush2.bf16.msra.mxu0 %v1200
      %1241 = vmatprep.subr.bf16.mxu0 0
      %1242 = vmatpush2.bf16.msra.mxu0 %v1199
      %1243 = vmatprep.subr.bf16.mxu0 0
      %1244 = vmatpush2.bf16.msra.mxu0 %v1198
      %1245 = vmatprep.subr.bf16.mxu0 0
      %1246 = vmatpush2.bf16.msra.mxu0 %v1197
      %1247 = vmatprep.subr.bf16.mxu0 0
      %1248 = vmatpush2.bf16.msra.mxu0 %v1196
      %1249 = vmatprep.subr.bf16.mxu0 0
      %1250 = vmatpush2.bf16.msra.mxu0 %v1195
      %1251 = vmatprep.mubr.bf16.mxu0 %v1021
      %1252 = vmatmul.mubr.bf16.gmra.mxu0 %v1020
      %v1253 = vpop.f32.mrf.mxu0
      %v1254 = vadd.f32 %v1121, %v1253
      %v1255 = vpop.f32.mrf.mxu0
      %v1256 = vpop.f32.mrf.mxu0
      %v1257 = vadd.f32 %v1121, %v1256
      %v1258 = vpop.f32.mrf.mxu0
      %1259 = vmatprep.mubr.bf16.mxu0 %v1023
      %1260 = vmatmul.mubr.bf16.gmra.mxu0 %v1022
      %v1261 = vpop.f32.mrf.mxu0
      %v1262 = vadd.f32 %v1121, %v1261
      %v1263 = vpop.f32.mrf.mxu0
      %v1264 = vpop.f32.mrf.mxu0
      %v1265 = vadd.f32 %v1121, %v1264
      %v1266 = vpop.f32.mrf.mxu0
      %1267 = vmatprep.mubr.bf16.mxu0 %v1025
      %1268 = vmatmul.mubr.bf16.gmra.mxu0 %v1024
      %v1269 = vpop.f32.mrf.mxu0
      %v1270 = vadd.f32 %v1121, %v1269
      %v1271 = vpop.f32.mrf.mxu0
      %v1272 = vpop.f32.mrf.mxu0
      %v1273 = vadd.f32 %v1121, %v1272
      %v1274 = vpop.f32.mrf.mxu0
      %1275 = vmatprep.mubr.bf16.mxu0 %v1027
      %1276 = vmatmul.mubr.bf16.gmra.mxu0 %v1026
      %v1277 = vpop.f32.mrf.mxu0
      %v1278 = vadd.f32 %v1121, %v1277
      %v1279 = vpop.f32.mrf.mxu0
      %v1280 = vpop.f32.mrf.mxu0
      %v1281 = vadd.f32 %v1121, %v1280
      %v1282 = vpop.f32.mrf.mxu0
      %1283 = vmatprep.mubr.bf16.mxu0 %v1029
      %1284 = vmatmul.mubr.bf16.gmra.mxu0 %v1028
      %v1285 = vpop.f32.mrf.mxu0
      %v1286 = vadd.f32 %v1121, %v1285
      %v1287 = vpop.f32.mrf.mxu0
      %v1288 = vpop.f32.mrf.mxu0
      %v1289 = vadd.f32 %v1121, %v1288
      %v1290 = vpop.f32.mrf.mxu0
      %1291 = vmatprep.mubr.bf16.mxu0 %v1031
      %1292 = vmatmul.mubr.bf16.gmra.mxu0 %v1030
      %v1293 = vpop.f32.mrf.mxu0
      %v1294 = vadd.f32 %v1121, %v1293
      %v1295 = vpop.f32.mrf.mxu0
      %v1296 = vpop.f32.mrf.mxu0
      %v1297 = vadd.f32 %v1121, %v1296
      %v1298 = vpop.f32.mrf.mxu0
      %1299 = vmatprep.mubr.bf16.mxu0 %v1033
      %1300 = vmatmul.mubr.bf16.gmra.mxu0 %v1032
      %v1301 = vpop.f32.mrf.mxu0
      %v1302 = vadd.f32 %v1121, %v1301
      %v1303 = vpop.f32.mrf.mxu0
      %v1304 = vpop.f32.mrf.mxu0
      %v1305 = vadd.f32 %v1121, %v1304
      %v1306 = vpop.f32.mrf.mxu0
      %1307 = vmatprep.mubr.bf16.mxu0 %v1035
      %1308 = vmatmul.mubr.bf16.gmra.mxu0 %v1034
      %v1309 = vpop.f32.mrf.mxu0
      %v1310 = vadd.f32 %v1121, %v1309
      %v1311 = vpop.f32.mrf.mxu0
      %v1312 = vpop.f32.mrf.mxu0
      %v1313 = vadd.f32 %v1121, %v1312
      %v1314 = vpop.f32.mrf.mxu0
      %1315 = vmatprep.mubr.bf16.mxu0 %v1037
      %1316 = vmatmul.mubr.bf16.gmra.mxu0 %v1036
      %v1317 = vpop.f32.mrf.mxu0
      %v1318 = vadd.f32 %v1121, %v1317
      %v1319 = vpop.f32.mrf.mxu0
      %v1320 = vpop.f32.mrf.mxu0
      %v1321 = vadd.f32 %v1121, %v1320
      %v1322 = vpop.f32.mrf.mxu0
      %1323 = vmatprep.mubr.bf16.mxu0 %v1039
      %1324 = vmatmul.mubr.bf16.gmra.mxu0 %v1038
      %v1325 = vpop.f32.mrf.mxu0
      %v1326 = vadd.f32 %v1121, %v1325
      %v1327 = vpop.f32.mrf.mxu0
      %v1328 = vpop.f32.mrf.mxu0
      %v1329 = vadd.f32 %v1121, %v1328
      %v1330 = vpop.f32.mrf.mxu0
      %1331 = vmatprep.mubr.bf16.mxu0 %v1041
      %1332 = vmatmul.mubr.bf16.gmra.mxu0 %v1040
      %v1333 = vpop.f32.mrf.mxu0
      %v1334 = vadd.f32 %v1121, %v1333
      %v1335 = vpop.f32.mrf.mxu0
      %v1336 = vpop.f32.mrf.mxu0
      %v1337 = vadd.f32 %v1121, %v1336
      %v1338 = vpop.f32.mrf.mxu0
      %1339 = vmatprep.mubr.bf16.mxu0 %v1043
      %1340 = vmatmul.mubr.bf16.gmra.mxu0 %v1042
      %v1341 = vpop.f32.mrf.mxu0
      %v1342 = vadd.f32 %v1121, %v1341
      %v1343 = vpop.f32.mrf.mxu0
      %v1344 = vpop.f32.mrf.mxu0
      %v1345 = vadd.f32 %v1121, %v1344
      %v1346 = vpop.f32.mrf.mxu0
      %1347 = vmatprep.mubr.bf16.mxu0 %v1045
      %1348 = vmatmul.mubr.bf16.gmra.mxu0 %v1044
      %v1349 = vpop.f32.mrf.mxu0
      %v1350 = vadd.f32 %v1121, %v1349
      %v1351 = vpop.f32.mrf.mxu0
      %v1352 = vpop.f32.mrf.mxu0
      %v1353 = vadd.f32 %v1121, %v1352
      %v1354 = vpop.f32.mrf.mxu0
      %1355 = vmatprep.mubr.bf16.mxu0 %v1047
      %1356 = vmatmul.mubr.bf16.gmra.mxu0 %v1046
      %v1357 = vpop.f32.mrf.mxu0
      %v1358 = vadd.f32 %v1121, %v1357
      %v1359 = vpop.f32.mrf.mxu0
      %v1360 = vpop.f32.mrf.mxu0
      %v1361 = vadd.f32 %v1121, %v1360
      %v1362 = vpop.f32.mrf.mxu0
      %1363 = vmatprep.mubr.bf16.mxu0 %v1049
      %1364 = vmatmul.mubr.bf16.gmra.mxu0 %v1048
      %v1365 = vpop.f32.mrf.mxu0
      %v1366 = vadd.f32 %v1121, %v1365
      %v1367 = vpop.f32.mrf.mxu0
      %v1368 = vpop.f32.mrf.mxu0
      %v1369 = vadd.f32 %v1121, %v1368
      %v1370 = vpop.f32.mrf.mxu0
      %1371 = vmatprep.mubr.bf16.mxu0 %v1051
      %1372 = vmatmul.mubr.bf16.gmra.mxu0 %v1050
      %v1373 = vpop.f32.mrf.mxu0
      %v1374 = vadd.f32 %v1121, %v1373
      %v1375 = vpop.f32.mrf.mxu0
      %v1376 = vpop.f32.mrf.mxu0
      %v1377 = vadd.f32 %v1121, %v1376
      %v1378 = vpop.f32.mrf.mxu0
      %1379 = vmatprep.mubr.bf16.mxu0 %v1053
      %1380 = vmatmul.mubr.bf16.gmra.mxu0 %v1052
      %v1381 = vpop.f32.mrf.mxu0
      %v1382 = vadd.f32 %v1121, %v1381
      %v1383 = vpop.f32.mrf.mxu0
      %v1384 = vpop.f32.mrf.mxu0
      %v1385 = vadd.f32 %v1121, %v1384
      %v1386 = vpop.f32.mrf.mxu0
      %1387 = vmatprep.mubr.bf16.mxu0 %v1055
      %1388 = vmatmul.mubr.bf16.gmra.mxu0 %v1054
      %v1389 = vpop.f32.mrf.mxu0
      %v1390 = vadd.f32 %v1121, %v1389
      %v1391 = vpop.f32.mrf.mxu0
      %v1392 = vpop.f32.mrf.mxu0
      %v1393 = vadd.f32 %v1121, %v1392
      %v1394 = vpop.f32.mrf.mxu0
      %1395 = vmatprep.mubr.bf16.mxu0 %v1057
      %1396 = vmatmul.mubr.bf16.gmra.mxu0 %v1056
      %v1397 = vpop.f32.mrf.mxu0
      %v1398 = vadd.f32 %v1121, %v1397
      %v1399 = vpop.f32.mrf.mxu0
      %v1400 = vpop.f32.mrf.mxu0
      %v1401 = vadd.f32 %v1121, %v1400
      %v1402 = vpop.f32.mrf.mxu0
      %1403 = vmatprep.mubr.bf16.mxu0 %v1059
      %1404 = vmatmul.mubr.bf16.gmra.mxu0 %v1058
      %v1405 = vpop.f32.mrf.mxu0
      %v1406 = vadd.f32 %v1121, %v1405
      %v1407 = vpop.f32.mrf.mxu0
      %v1408 = vpop.f32.mrf.mxu0
      %v1409 = vadd.f32 %v1121, %v1408
      %v1410 = vpop.f32.mrf.mxu0
      %1411 = vmatprep.mubr.bf16.mxu0 %v1061
      %1412 = vmatmul.mubr.bf16.gmra.mxu0 %v1060
      %v1413 = vpop.f32.mrf.mxu0
      %v1414 = vadd.f32 %v1121, %v1413
      %v1415 = vpop.f32.mrf.mxu0
      %v1416 = vpop.f32.mrf.mxu0
      %v1417 = vadd.f32 %v1121, %v1416
      %v1418 = vpop.f32.mrf.mxu0
      %1419 = vmatprep.mubr.bf16.mxu0 %v1063
      %1420 = vmatmul.mubr.bf16.gmra.mxu0 %v1062
      %v1421 = vpop.f32.mrf.mxu0
      %v1422 = vadd.f32 %v1121, %v1421
      %v1423 = vpop.f32.mrf.mxu0
      %v1424 = vpop.f32.mrf.mxu0
      %v1425 = vadd.f32 %v1121, %v1424
      %v1426 = vpop.f32.mrf.mxu0
      %1427 = vmatprep.mubr.bf16.mxu0 %v1065
      %1428 = vmatmul.mubr.bf16.gmra.mxu0 %v1064
      %v1429 = vpop.f32.mrf.mxu0
      %v1430 = vadd.f32 %v1121, %v1429
      %v1431 = vpop.f32.mrf.mxu0
      %v1432 = vpop.f32.mrf.mxu0
      %v1433 = vadd.f32 %v1121, %v1432
      %v1434 = vpop.f32.mrf.mxu0
      %1435 = vmatprep.mubr.bf16.mxu0 %v1067
      %1436 = vmatmul.mubr.bf16.gmra.mxu0 %v1066
      %v1437 = vpop.f32.mrf.mxu0
      %v1438 = vadd.f32 %v1121, %v1437
      %v1439 = vpop.f32.mrf.mxu0
      %v1440 = vpop.f32.mrf.mxu0
      %v1441 = vadd.f32 %v1121, %v1440
      %v1442 = vpop.f32.mrf.mxu0
      %1443 = vmatprep.mubr.bf16.mxu0 %v1069
      %1444 = vmatmul.mubr.bf16.gmra.mxu0 %v1068
      %v1445 = vpop.f32.mrf.mxu0
      %v1446 = vadd.f32 %v1121, %v1445
      %v1447 = vpop.f32.mrf.mxu0
      %v1448 = vpop.f32.mrf.mxu0
      %v1449 = vadd.f32 %v1121, %v1448
      %v1450 = vpop.f32.mrf.mxu0
      %1451 = vmatprep.mubr.bf16.mxu0 %v1071
      %1452 = vmatmul.mubr.bf16.gmra.mxu0 %v1070
      %v1453 = vpop.f32.mrf.mxu0
      %v1454 = vadd.f32 %v1121, %v1453
      %v1455 = vpop.f32.mrf.mxu0
      %v1456 = vpop.f32.mrf.mxu0
      %v1457 = vadd.f32 %v1121, %v1456
      %v1458 = vpop.f32.mrf.mxu0
      %1459 = vmatprep.mubr.bf16.mxu0 %v1073
      %1460 = vmatmul.mubr.bf16.gmra.mxu0 %v1072
      %v1461 = vpop.f32.mrf.mxu0
      %v1462 = vadd.f32 %v1121, %v1461
      %v1463 = vpop.f32.mrf.mxu0
      %v1464 = vpop.f32.mrf.mxu0
      %v1465 = vadd.f32 %v1121, %v1464
      %v1466 = vpop.f32.mrf.mxu0
      %1467 = vmatprep.mubr.bf16.mxu0 %v1075
      %1468 = vmatmul.mubr.bf16.gmra.mxu0 %v1074
      %v1469 = vpop.f32.mrf.mxu0
      %v1470 = vadd.f32 %v1121, %v1469
      %v1471 = vpop.f32.mrf.mxu0
      %v1472 = vpop.f32.mrf.mxu0
      %v1473 = vadd.f32 %v1121, %v1472
      %v1474 = vpop.f32.mrf.mxu0
      %1475 = vmatprep.mubr.bf16.mxu0 %v1077
      %1476 = vmatmul.mubr.bf16.gmra.mxu0 %v1076
      %v1477 = vpop.f32.mrf.mxu0
      %v1478 = vadd.f32 %v1121, %v1477
      %v1479 = vpop.f32.mrf.mxu0
      %v1480 = vpop.f32.mrf.mxu0
      %v1481 = vadd.f32 %v1121, %v1480
      %v1482 = vpop.f32.mrf.mxu0
      %1483 = vmatprep.mubr.bf16.mxu0 %v1079
      %1484 = vmatmul.mubr.bf16.gmra.mxu0 %v1078
      %v1485 = vpop.f32.mrf.mxu0
      %v1486 = vadd.f32 %v1121, %v1485
      %v1487 = vpop.f32.mrf.mxu0
      %v1488 = vpop.f32.mrf.mxu0
      %v1489 = vadd.f32 %v1121, %v1488
      %v1490 = vpop.f32.mrf.mxu0
      %1491 = vmatprep.mubr.bf16.mxu0 %v1081
      %1492 = vmatmul.mubr.bf16.gmra.mxu0 %v1080
      %v1493 = vpop.f32.mrf.mxu0
      %v1494 = vadd.f32 %v1121, %v1493
      %v1495 = vpop.f32.mrf.mxu0
      %v1496 = vpop.f32.mrf.mxu0
      %v1497 = vadd.f32 %v1121, %v1496
      %v1498 = vpop.f32.mrf.mxu0
      %1499 = vmatprep.mubr.bf16.mxu0 %v1083
      %1500 = vmatmul.mubr.bf16.gmra.mxu0 %v1082
      %v1501 = vpop.f32.mrf.mxu0
      %v1502 = vadd.f32 %v1121, %v1501
      %v1503 = vpop.f32.mrf.mxu0
      %v1504 = vpop.f32.mrf.mxu0
      %v1505 = vadd.f32 %v1121, %v1504
      %v1506 = vpop.f32.mrf.mxu0
      %1507 = vdwg.mxu0
      %v1508 = vmax.f32 %v1254, 0.0
      %v1509 = vmax.f32 %v1257, 0.0
      %v1510 = vmax.f32 %v1262, 0.0
      %v1511 = vmax.f32 %v1265, 0.0
      %v1512 = vmax.f32 %v1270, 0.0
      %v1513 = vmax.f32 %v1273, 0.0
      %v1514 = vmax.f32 %v1278, 0.0
      %v1515 = vmax.f32 %v1281, 0.0
      %v1516 = vmax.f32 %v1286, 0.0
      %v1517 = vmax.f32 %v1289, 0.0
      %v1518 = vmax.f32 %v1294, 0.0
      %v1519 = vmax.f32 %v1297, 0.0
      %v1520 = vmax.f32 %v1302, 0.0
      %v1521 = vmax.f32 %v1305, 0.0
      %v1522 = vmax.f32 %v1310, 0.0
      %v1523 = vmax.f32 %v1313, 0.0
      %v1524 = vmax.f32 %v1318, 0.0
      %v1525 = vmax.f32 %v1321, 0.0
      %v1526 = vmax.f32 %v1326, 0.0
      %v1527 = vmax.f32 %v1329, 0.0
      %v1528 = vmax.f32 %v1334, 0.0
      %v1529 = vmax.f32 %v1337, 0.0
      %v1530 = vmax.f32 %v1342, 0.0
      %v1531 = vmax.f32 %v1345, 0.0
      %v1532 = vmax.f32 %v1350, 0.0
      %v1533 = vmax.f32 %v1353, 0.0
      %v1534 = vmax.f32 %v1358, 0.0
      %v1535 = vmax.f32 %v1361, 0.0
      %v1536 = vmax.f32 %v1366, 0.0
      %v1537 = vmax.f32 %v1369, 0.0
      %v1538 = vmax.f32 %v1374, 0.0
      %v1539 = vmax.f32 %v1377, 0.0
      %v1540 = vmax.f32 %v1382, 0.0
      %v1541 = vmax.f32 %v1385, 0.0
      %v1542 = vmax.f32 %v1390, 0.0
      %v1543 = vmax.f32 %v1393, 0.0
      %v1544 = vmax.f32 %v1398, 0.0
      %v1545 = vmax.f32 %v1401, 0.0
      %v1546 = vmax.f32 %v1406, 0.0
      %v1547 = vmax.f32 %v1409, 0.0
      %v1548 = vmax.f32 %v1414, 0.0
      %v1549 = vmax.f32 %v1417, 0.0
      %v1550 = vmax.f32 %v1422, 0.0
      %v1551 = vmax.f32 %v1425, 0.0
      %v1552 = vmax.f32 %v1430, 0.0
      %v1553 = vmax.f32 %v1433, 0.0
      %v1554 = vmax.f32 %v1438, 0.0
      %v1555 = vmax.f32 %v1441, 0.0
      %v1556 = vmax.f32 %v1446, 0.0
      %v1557 = vmax.f32 %v1449, 0.0
      %v1558 = vmax.f32 %v1454, 0.0
      %v1559 = vmax.f32 %v1457, 0.0
      %v1560 = vmax.f32 %v1462, 0.0
      %v1561 = vmax.f32 %v1465, 0.0
      %v1562 = vmax.f32 %v1470, 0.0
      %v1563 = vmax.f32 %v1473, 0.0
      %v1564 = vmax.f32 %v1478, 0.0
      %v1565 = vmax.f32 %v1481, 0.0
      %v1566 = vmax.f32 %v1486, 0.0
      %v1567 = vmax.f32 %v1489, 0.0
      %v1568 = vmax.f32 %v1494, 0.0
      %v1569 = vmax.f32 %v1497, 0.0
      %v1570 = vmax.f32 %v1502, 0.0
      %v1571 = vmax.f32 %v1505, 0.0
      %v1572 = vld [vmem:[%s5] sm:$0x1]
      %v1574 = vlaneseq
      %v1575 = vshrl.u32 %v1574, 7
      %v1576 = vsub.s32 0, %v1575
      %v1577 = vrot.slane %v1572, %v1576
      %v1579 = vmul.f32 %v1508, %v1577
      %v1580 = vmul.f32 %v1509, %v1577
      %v1581 = vmul.f32 %v1510, %v1577
      %v1582 = vmul.f32 %v1511, %v1577
      %v1583 = vmul.f32 %v1512, %v1577
      %v1584 = vmul.f32 %v1513, %v1577
      %v1585 = vmul.f32 %v1514, %v1577
      %v1586 = vmul.f32 %v1515, %v1577
      %v1587 = vmul.f32 %v1516, %v1577
      %v1588 = vmul.f32 %v1517, %v1577
      %v1589 = vmul.f32 %v1518, %v1577
      %v1590 = vmul.f32 %v1519, %v1577
      %v1591 = vmul.f32 %v1520, %v1577
      %v1592 = vmul.f32 %v1521, %v1577
      %v1593 = vmul.f32 %v1522, %v1577
      %v1594 = vmul.f32 %v1523, %v1577
      %v1595 = vmul.f32 %v1524, %v1577
      %v1596 = vmul.f32 %v1525, %v1577
      %v1597 = vmul.f32 %v1526, %v1577
      %v1598 = vmul.f32 %v1527, %v1577
      %v1599 = vmul.f32 %v1528, %v1577
      %v1600 = vmul.f32 %v1529, %v1577
      %v1601 = vmul.f32 %v1530, %v1577
      %v1602 = vmul.f32 %v1531, %v1577
      %v1603 = vmul.f32 %v1532, %v1577
      %v1604 = vmul.f32 %v1533, %v1577
      %v1605 = vmul.f32 %v1534, %v1577
      %v1606 = vmul.f32 %v1535, %v1577
      %v1607 = vmul.f32 %v1536, %v1577
      %v1608 = vmul.f32 %v1537, %v1577
      %v1609 = vmul.f32 %v1538, %v1577
      %v1610 = vmul.f32 %v1539, %v1577
      %v1611 = vmul.f32 %v1540, %v1577
      %v1612 = vmul.f32 %v1541, %v1577
      %v1613 = vmul.f32 %v1542, %v1577
      %v1614 = vmul.f32 %v1543, %v1577
      %v1615 = vmul.f32 %v1544, %v1577
      %v1616 = vmul.f32 %v1545, %v1577
      %v1617 = vmul.f32 %v1546, %v1577
      %v1618 = vmul.f32 %v1547, %v1577
      %v1619 = vmul.f32 %v1548, %v1577
      %v1620 = vmul.f32 %v1549, %v1577
      %v1621 = vmul.f32 %v1550, %v1577
      %v1622 = vmul.f32 %v1551, %v1577
      %v1623 = vmul.f32 %v1552, %v1577
      %v1624 = vmul.f32 %v1553, %v1577
      %v1625 = vmul.f32 %v1554, %v1577
      %v1626 = vmul.f32 %v1555, %v1577
      %v1627 = vmul.f32 %v1556, %v1577
      %v1628 = vmul.f32 %v1557, %v1577
      %v1629 = vmul.f32 %v1558, %v1577
      %v1630 = vmul.f32 %v1559, %v1577
      %v1631 = vmul.f32 %v1560, %v1577
      %v1632 = vmul.f32 %v1561, %v1577
      %v1633 = vmul.f32 %v1562, %v1577
      %v1634 = vmul.f32 %v1563, %v1577
      %v1635 = vmul.f32 %v1564, %v1577
      %v1636 = vmul.f32 %v1565, %v1577
      %v1637 = vmul.f32 %v1566, %v1577
      %v1638 = vmul.f32 %v1567, %v1577
      %v1639 = vmul.f32 %v1568, %v1577
      %v1640 = vmul.f32 %v1569, %v1577
      %v1641 = vmul.f32 %v1570, %v1577
      %v1642 = vmul.f32 %v1571, %v1577
      %1643 = vadd.xlane.f32.xlu0 %v1579
      %v1644 = vpop.xlane.xlu0 %1643
      %1645 = vadd.xlane.f32.xlu0 %v1580
      %v1646 = vpop.xlane.xlu0 %1645
      %1647 = vadd.xlane.f32.xlu0 %v1581
      %v1648 = vpop.xlane.xlu0 %1647
      %1649 = vadd.xlane.f32.xlu0 %v1582
      %v1650 = vpop.xlane.xlu0 %1649
      %1651 = vadd.xlane.f32.xlu0 %v1583
      %v1652 = vpop.xlane.xlu0 %1651
      %1653 = vadd.xlane.f32.xlu0 %v1584
      %v1654 = vpop.xlane.xlu0 %1653
      %1655 = vadd.xlane.f32.xlu0 %v1585
      %v1656 = vpop.xlane.xlu0 %1655
      %1657 = vadd.xlane.f32.xlu0 %v1586
      %v1658 = vpop.xlane.xlu0 %1657
      %1659 = vadd.xlane.f32.xlu0 %v1587
      %v1660 = vpop.xlane.xlu0 %1659
      %1661 = vadd.xlane.f32.xlu0 %v1588
      %v1662 = vpop.xlane.xlu0 %1661
      %1663 = vadd.xlane.f32.xlu0 %v1589
      %v1664 = vpop.xlane.xlu0 %1663
      %1665 = vadd.xlane.f32.xlu0 %v1590
      %v1666 = vpop.xlane.xlu0 %1665
      %1667 = vadd.xlane.f32.xlu0 %v1591
      %v1668 = vpop.xlane.xlu0 %1667
      %1669 = vadd.xlane.f32.xlu0 %v1592
      %v1670 = vpop.xlane.xlu0 %1669
      %1671 = vadd.xlane.f32.xlu0 %v1593
      %v1672 = vpop.xlane.xlu0 %1671
      %1673 = vadd.xlane.f32.xlu0 %v1594
      %v1674 = vpop.xlane.xlu0 %1673
      %1675 = vadd.xlane.f32.xlu0 %v1595
      %v1676 = vpop.xlane.xlu0 %1675
      %1677 = vadd.xlane.f32.xlu0 %v1596
      %v1678 = vpop.xlane.xlu0 %1677
      %1679 = vadd.xlane.f32.xlu0 %v1597
      %v1680 = vpop.xlane.xlu0 %1679
      %1681 = vadd.xlane.f32.xlu0 %v1598
      %v1682 = vpop.xlane.xlu0 %1681
      %1683 = vadd.xlane.f32.xlu0 %v1599
      %v1684 = vpop.xlane.xlu0 %1683
      %1685 = vadd.xlane.f32.xlu0 %v1600
      %v1686 = vpop.xlane.xlu0 %1685
      %1687 = vadd.xlane.f32.xlu0 %v1601
      %v1688 = vpop.xlane.xlu0 %1687
      %1689 = vadd.xlane.f32.xlu0 %v1602
      %v1690 = vpop.xlane.xlu0 %1689
      %1691 = vadd.xlane.f32.xlu0 %v1603
      %v1692 = vpop.xlane.xlu0 %1691
      %1693 = vadd.xlane.f32.xlu0 %v1604
      %v1694 = vpop.xlane.xlu0 %1693
      %1695 = vadd.xlane.f32.xlu0 %v1605
      %v1696 = vpop.xlane.xlu0 %1695
      %1697 = vadd.xlane.f32.xlu0 %v1606
      %v1698 = vpop.xlane.xlu0 %1697
      %1699 = vadd.xlane.f32.xlu0 %v1607
      %v1700 = vpop.xlane.xlu0 %1699
      %1701 = vadd.xlane.f32.xlu0 %v1608
      %v1702 = vpop.xlane.xlu0 %1701
      %1703 = vadd.xlane.f32.xlu0 %v1609
      %v1704 = vpop.xlane.xlu0 %1703
      %1705 = vadd.xlane.f32.xlu0 %v1610
      %v1706 = vpop.xlane.xlu0 %1705
      %1707 = vadd.xlane.f32.xlu0 %v1611
      %v1708 = vpop.xlane.xlu0 %1707
      %1709 = vadd.xlane.f32.xlu0 %v1612
      %v1710 = vpop.xlane.xlu0 %1709
      %1711 = vadd.xlane.f32.xlu0 %v1613
      %v1712 = vpop.xlane.xlu0 %1711
      %1713 = vadd.xlane.f32.xlu0 %v1614
      %v1714 = vpop.xlane.xlu0 %1713
      %1715 = vadd.xlane.f32.xlu0 %v1615
      %v1716 = vpop.xlane.xlu0 %1715
      %1717 = vadd.xlane.f32.xlu0 %v1616
      %v1718 = vpop.xlane.xlu0 %1717
      %1719 = vadd.xlane.f32.xlu0 %v1617
      %v1720 = vpop.xlane.xlu0 %1719
      %1721 = vadd.xlane.f32.xlu0 %v1618
      %v1722 = vpop.xlane.xlu0 %1721
      %1723 = vadd.xlane.f32.xlu0 %v1619
      %v1724 = vpop.xlane.xlu0 %1723
      %1725 = vadd.xlane.f32.xlu0 %v1620
      %v1726 = vpop.xlane.xlu0 %1725
      %1727 = vadd.xlane.f32.xlu0 %v1621
      %v1728 = vpop.xlane.xlu0 %1727
      %1729 = vadd.xlane.f32.xlu0 %v1622
      %v1730 = vpop.xlane.xlu0 %1729
      %1731 = vadd.xlane.f32.xlu0 %v1623
      %v1732 = vpop.xlane.xlu0 %1731
      %1733 = vadd.xlane.f32.xlu0 %v1624
      %v1734 = vpop.xlane.xlu0 %1733
      %1735 = vadd.xlane.f32.xlu0 %v1625
      %v1736 = vpop.xlane.xlu0 %1735
      %1737 = vadd.xlane.f32.xlu0 %v1626
      %v1738 = vpop.xlane.xlu0 %1737
      %1739 = vadd.xlane.f32.xlu0 %v1627
      %v1740 = vpop.xlane.xlu0 %1739
      %1741 = vadd.xlane.f32.xlu0 %v1628
      %v1742 = vpop.xlane.xlu0 %1741
      %1743 = vadd.xlane.f32.xlu0 %v1629
      %v1744 = vpop.xlane.xlu0 %1743
      %1745 = vadd.xlane.f32.xlu0 %v1630
      %v1746 = vpop.xlane.xlu0 %1745
      %1747 = vadd.xlane.f32.xlu0 %v1631
      %v1748 = vpop.xlane.xlu0 %1747
      %1749 = vadd.xlane.f32.xlu0 %v1632
      %v1750 = vpop.xlane.xlu0 %1749
      %1751 = vadd.xlane.f32.xlu0 %v1633
      %v1752 = vpop.xlane.xlu0 %1751
      %1753 = vadd.xlane.f32.xlu0 %v1634
      %v1754 = vpop.xlane.xlu0 %1753
      %1755 = vadd.xlane.f32.xlu0 %v1635
      %v1756 = vpop.xlane.xlu0 %1755
      %1757 = vadd.xlane.f32.xlu0 %v1636
      %v1758 = vpop.xlane.xlu0 %1757
      %1759 = vadd.xlane.f32.xlu0 %v1637
      %v1760 = vpop.xlane.xlu0 %1759
      %1761 = vadd.xlane.f32.xlu0 %v1638
      %v1762 = vpop.xlane.xlu0 %1761
      %1763 = vadd.xlane.f32.xlu0 %v1639
      %v1764 = vpop.xlane.xlu0 %1763
      %1765 = vadd.xlane.f32.xlu0 %v1640
      %v1766 = vpop.xlane.xlu0 %1765
      %1767 = vadd.xlane.f32.xlu0 %v1641
      %v1768 = vpop.xlane.xlu0 %1767
      %1769 = vadd.xlane.f32.xlu0 %v1642
      %v1770 = vpop.xlane.xlu0 %1769
      %s1771 = sld [smem:[#allocation2]]
      %v1772 = vstv %s1771
      %v1773 = vadd.f32 %v1644, %v1772
      %v1774 = vadd.f32 %v1646, %v1772
      %v1775 = vadd.f32 %v1648, %v1772
      %v1776 = vadd.f32 %v1650, %v1772
      %v1777 = vadd.f32 %v1652, %v1772
      %v1778 = vadd.f32 %v1654, %v1772
      %v1779 = vadd.f32 %v1656, %v1772
      %v1780 = vadd.f32 %v1658, %v1772
      %v1781 = vadd.f32 %v1660, %v1772
      %v1782 = vadd.f32 %v1662, %v1772
      %v1783 = vadd.f32 %v1664, %v1772
      %v1784 = vadd.f32 %v1666, %v1772
      %v1785 = vadd.f32 %v1668, %v1772
      %v1786 = vadd.f32 %v1670, %v1772
      %v1787 = vadd.f32 %v1672, %v1772
      %v1788 = vadd.f32 %v1674, %v1772
      %v1789 = vadd.f32 %v1676, %v1772
      %v1790 = vadd.f32 %v1678, %v1772
      %v1791 = vadd.f32 %v1680, %v1772
      %v1792 = vadd.f32 %v1682, %v1772
      %v1793 = vadd.f32 %v1684, %v1772
      %v1794 = vadd.f32 %v1686, %v1772
      %v1795 = vadd.f32 %v1688, %v1772
      %v1796 = vadd.f32 %v1690, %v1772
      %v1797 = vadd.f32 %v1692, %v1772
      %v1798 = vadd.f32 %v1694, %v1772
      %v1799 = vadd.f32 %v1696, %v1772
      %v1800 = vadd.f32 %v1698, %v1772
      %v1801 = vadd.f32 %v1700, %v1772
      %v1802 = vadd.f32 %v1702, %v1772
      %v1803 = vadd.f32 %v1704, %v1772
      %v1804 = vadd.f32 %v1706, %v1772
      %v1805 = vadd.f32 %v1708, %v1772
      %v1806 = vadd.f32 %v1710, %v1772
      %v1807 = vadd.f32 %v1712, %v1772
      %v1808 = vadd.f32 %v1714, %v1772
      %v1809 = vadd.f32 %v1716, %v1772
      %v1810 = vadd.f32 %v1718, %v1772
      %v1811 = vadd.f32 %v1720, %v1772
      %v1812 = vadd.f32 %v1722, %v1772
      %v1813 = vadd.f32 %v1724, %v1772
      %v1814 = vadd.f32 %v1726, %v1772
      %v1815 = vadd.f32 %v1728, %v1772
      %v1816 = vadd.f32 %v1730, %v1772
      %v1817 = vadd.f32 %v1732, %v1772
      %v1818 = vadd.f32 %v1734, %v1772
      %v1819 = vadd.f32 %v1736, %v1772
      %v1820 = vadd.f32 %v1738, %v1772
      %v1821 = vadd.f32 %v1740, %v1772
      %v1822 = vadd.f32 %v1742, %v1772
      %v1823 = vadd.f32 %v1744, %v1772
      %v1824 = vadd.f32 %v1746, %v1772
      %v1825 = vadd.f32 %v1748, %v1772
      %v1826 = vadd.f32 %v1750, %v1772
      %v1827 = vadd.f32 %v1752, %v1772
      %v1828 = vadd.f32 %v1754, %v1772
      %v1829 = vadd.f32 %v1756, %v1772
      %v1830 = vadd.f32 %v1758, %v1772
      %v1831 = vadd.f32 %v1760, %v1772
      %v1832 = vadd.f32 %v1762, %v1772
      %v1833 = vadd.f32 %v1764, %v1772
      %v1834 = vadd.f32 %v1766, %v1772
      %v1835 = vadd.f32 %v1768, %v1772
      %v1836 = vadd.f32 %v1770, %v1772
      %vm1837 = vcmask 7168
      %1838 = vst.msk [vmem:[%s281] sm:$0xff] %vm1837, %v1773
      %1839 = vst.msk [vmem:[%s281 + $0x8] sm:$0xff] %vm1837, %v1774
      %1840 = vst.msk [vmem:[%s281 + $0x10] sm:$0xff] %vm1837, %v1775
      %1841 = vst.msk [vmem:[%s281 + $0x18] sm:$0xff] %vm1837, %v1776
      %1842 = vst.msk [vmem:[%s281 + $0x20] sm:$0xff] %vm1837, %v1777
      %1843 = vst.msk [vmem:[%s281 + $0x28] sm:$0xff] %vm1837, %v1778
      %1844 = vst.msk [vmem:[%s281 + $0x30] sm:$0xff] %vm1837, %v1779
      %1845 = vst.msk [vmem:[%s281 + $0x38] sm:$0xff] %vm1837, %v1780
      %1846 = vst.msk [vmem:[%s281 + $0x40] sm:$0xff] %vm1837, %v1781
      %1847 = vst.msk [vmem:[%s281 + $0x48] sm:$0xff] %vm1837, %v1782
      %1848 = vst.msk [vmem:[%s281 + $0x50] sm:$0xff] %vm1837, %v1783
      %1849 = vst.msk [vmem:[%s281 + $0x58] sm:$0xff] %vm1837, %v1784
      %1850 = vst.msk [vmem:[%s281 + $0x60] sm:$0xff] %vm1837, %v1785
      %1851 = vst.msk [vmem:[%s281 + $0x68] sm:$0xff] %vm1837, %v1786
      %1852 = vst.msk [vmem:[%s281 + $0x70] sm:$0xff] %vm1837, %v1787
      %1853 = vst.msk [vmem:[%s281 + $0x78] sm:$0xff] %vm1837, %v1788
      %1854 = vst.msk [vmem:[%s281 + $0x80] sm:$0xff] %vm1837, %v1789
      %1855 = vst.msk [vmem:[%s281 + $0x88] sm:$0xff] %vm1837, %v1790
      %1856 = vst.msk [vmem:[%s281 + $0x90] sm:$0xff] %vm1837, %v1791
      %1857 = vst.msk [vmem:[%s281 + $0x98] sm:$0xff] %vm1837, %v1792
      %1858 = vst.msk [vmem:[%s281 + $0xa0] sm:$0xff] %vm1837, %v1793
      %1859 = vst.msk [vmem:[%s281 + $0xa8] sm:$0xff] %vm1837, %v1794
      %1860 = vst.msk [vmem:[%s281 + $0xb0] sm:$0xff] %vm1837, %v1795
      %1861 = vst.msk [vmem:[%s281 + $0xb8] sm:$0xff] %vm1837, %v1796
      %1862 = vst.msk [vmem:[%s281 + $0xc0] sm:$0xff] %vm1837, %v1797
      %1863 = vst.msk [vmem:[%s281 + $0xc8] sm:$0xff] %vm1837, %v1798
      %1864 = vst.msk [vmem:[%s281 + $0xd0] sm:$0xff] %vm1837, %v1799
      %1865 = vst.msk [vmem:[%s281 + $0xd8] sm:$0xff] %vm1837, %v1800
      %1866 = vst.msk [vmem:[%s281 + $0xe0] sm:$0xff] %vm1837, %v1801
      %1867 = vst.msk [vmem:[%s281 + $0xe8] sm:$0xff] %vm1837, %v1802
      %1868 = vst.msk [vmem:[%s281 + $0xf0] sm:$0xff] %vm1837, %v1803
      %1869 = vst.msk [vmem:[%s281 + $0xf8] sm:$0xff] %vm1837, %v1804
      %1870 = vst.msk [vmem:[%s281 + $0x100] sm:$0xff] %vm1837, %v1805
      %1871 = vst.msk [vmem:[%s281 + $0x108] sm:$0xff] %vm1837, %v1806
      %1872 = vst.msk [vmem:[%s281 + $0x110] sm:$0xff] %vm1837, %v1807
      %1873 = vst.msk [vmem:[%s281 + $0x118] sm:$0xff] %vm1837, %v1808
      %1874 = vst.msk [vmem:[%s281 + $0x120] sm:$0xff] %vm1837, %v1809
      %1875 = vst.msk [vmem:[%s281 + $0x128] sm:$0xff] %vm1837, %v1810
      %1876 = vst.msk [vmem:[%s281 + $0x130] sm:$0xff] %vm1837, %v1811
      %1877 = vst.msk [vmem:[%s281 + $0x138] sm:$0xff] %vm1837, %v1812
      %1878 = vst.msk [vmem:[%s281 + $0x140] sm:$0xff] %vm1837, %v1813
      %1879 = vst.msk [vmem:[%s281 + $0x148] sm:$0xff] %vm1837, %v1814
      %1880 = vst.msk [vmem:[%s281 + $0x150] sm:$0xff] %vm1837, %v1815
      %1881 = vst.msk [vmem:[%s281 + $0x158] sm:$0xff] %vm1837, %v1816
      %1882 = vst.msk [vmem:[%s281 + $0x160] sm:$0xff] %vm1837, %v1817
      %1883 = vst.msk [vmem:[%s281 + $0x168] sm:$0xff] %vm1837, %v1818
      %1884 = vst.msk [vmem:[%s281 + $0x170] sm:$0xff] %vm1837, %v1819
      %1885 = vst.msk [vmem:[%s281 + $0x178] sm:$0xff] %vm1837, %v1820
      %1886 = vst.msk [vmem:[%s281 + $0x180] sm:$0xff] %vm1837, %v1821
      %1887 = vst.msk [vmem:[%s281 + $0x188] sm:$0xff] %vm1837, %v1822
      %1888 = vst.msk [vmem:[%s281 + $0x190] sm:$0xff] %vm1837, %v1823
      %1889 = vst.msk [vmem:[%s281 + $0x198] sm:$0xff] %vm1837, %v1824
      %1890 = vst.msk [vmem:[%s281 + $0x1a0] sm:$0xff] %vm1837, %v1825
      %1891 = vst.msk [vmem:[%s281 + $0x1a8] sm:$0xff] %vm1837, %v1826
      %1892 = vst.msk [vmem:[%s281 + $0x1b0] sm:$0xff] %vm1837, %v1827
      %1893 = vst.msk [vmem:[%s281 + $0x1b8] sm:$0xff] %vm1837, %v1828
      %1894 = vst.msk [vmem:[%s281 + $0x1c0] sm:$0xff] %vm1837, %v1829
      %1895 = vst.msk [vmem:[%s281 + $0x1c8] sm:$0xff] %vm1837, %v1830
      %1896 = vst.msk [vmem:[%s281 + $0x1d0] sm:$0xff] %vm1837, %v1831
      %1897 = vst.msk [vmem:[%s281 + $0x1d8] sm:$0xff] %vm1837, %v1832
      %1898 = vst.msk [vmem:[%s281 + $0x1e0] sm:$0xff] %vm1837, %v1833
      %1899 = vst.msk [vmem:[%s281 + $0x1e8] sm:$0xff] %vm1837, %v1834
      %1900 = vst.msk [vmem:[%s281 + $0x1f0] sm:$0xff] %vm1837, %v1835
      %1901 = vst.msk [vmem:[%s281 + $0x1f8] sm:$0xff] %vm1837, %v1836
      %s1902 = smul.u32 64, %s19
      %p1903 = scmp.lt.s32.totalorder %s1902, 127
      %s1904 = scalar_select %p1903, %s1902, 127
      %s1905 = smul.addr %s1904, 8
      %s1906 = scalar_lea.vmem %s7, %s1905
      // Predicated region
      $region49: #{tpu_custom_call.1} parent=47 // pred_check
        %p1907 = pneg %p189
      $region50: #{tpu_custom_call.1} parent=47 // pred_check_branch
        %1909 = sbr.rel (%p1907) target = $region52
      $region51: #{tpu_custom_call.1} parent=47 // pred_region
        %s1910 = smul.u32 64, %s19
      $region52: #{tpu_custom_call.1} parent=47 // pred_fallthru
        _
    $region48: #{tpu_custom_call.1} parent=5 // pred_fallthru
      _
    %p1911 = scmp.le.s32.totalorder 2, %s14
    // Predicated region
    $region53: #{tpu_custom_call.1} parent=5 // pred_check
      %p1912 = pneg %p1911
    $region54: #{tpu_custom_call.1} parent=5 // pred_check_branch
      %1914 = sbr.rel (%p1912) target = $region56
    $region55: #{tpu_custom_call.1} parent=5 // pred_region
      %s1915 = ssub.s32 %s14, 2
      // Predicated region
      $region57: #{tpu_custom_call.1} parent=55 // pred_check
        %p1916 = pneg %p195
      $region58: #{tpu_custom_call.1} parent=55 // pred_check_branch
        %1918 = sbr.rel (%p1916) target = $region60
      $region59: #{tpu_custom_call.1} parent=55 // pred_region
        %s1919 = smul.u32 64, %s20
        %p1920 = scmp.lt.s32.totalorder %s1919, 127
        %s1921 = scalar_select %p1920, %s1919, 127
        %s1922 = smul.addr %s1921, 8
        %s1923 = scalar_lea.vmem %s7, %s1922
      $region60: #{tpu_custom_call.1} parent=55 // pred_fallthru
        _
    $region56: #{tpu_custom_call.1} parent=5 // pred_fallthru
      _
  $region6: #{tpu_custom_call.1} parent=0 // loop_footer
    %s18 = sadd.s32 1, %s14
  $region7: #{tpu_custom_call.1} parent=0 // loop_footer_branch
    %13 = sbr.rel target = $region3
  $region8: #{tpu_custom_call.1} parent=0 // loop_exit
    _

</llo_original>
